<compile_context>
chip_gen: v5e
topology: v5e:2x2
jax: 0.10.0
libtpu: 0.0.40
codegen_flags: <defaults>
</compile_context>

<pallas_src>
import functools

import jax
import jax.numpy as jnp
from jax.experimental import pallas as pl
from jax.experimental.pallas import tpu as pltpu


def _scsa_kernel(xh_ref, xwT_ref, inv_nh_ref, inv_nw_ref,
                 m_ref, vg_ref, wh_ref, bh_ref, scale_ref,
                 out_ref, fdd_scr, r_scr):
    """Per-batch fused SCSA: normalize, folded projections, softmax attention,
    residual, raw-reshape self-correlation — all inside VMEM."""
    HW, C = fdd_scr.shape
    G = HW // C

    # Normalization: multiply by precomputed reciprocal Frobenius norms.
    fn_h = xh_ref[...] * inv_nh_ref[...]          # (HW, C)  h-major rows
    fn_wT = xwT_ref[...] * inv_nw_ref[...]        # (C, HW)  w-major cols (pre-transposed)

    # s = f @ g^T with the two skinny projections folded into one dense C x C
    # contraction; per-row-constant bias terms dropped (softmax-invariant).
    fm = jnp.dot(fn_h, m_ref[...], preferred_element_type=jnp.float32) + vg_ref[...]
    s = jnp.dot(fm, fn_wT, preferred_element_type=jnp.float32)          # (HW, HW)

    # h projection (full C -> C).
    h = jnp.dot(fn_h, wh_ref[...], preferred_element_type=jnp.float32) + bh_ref[...]

    # softmax(dim=-1) with an EUP reciprocal instead of a divide.
    s_max = jnp.max(s, axis=-1, keepdims=True)
    e = jnp.exp(s - s_max)
    beta = e * pl.reciprocal(jnp.sum(e, axis=-1, keepdims=True), approx=True)

    o = jnp.dot(beta, h, preferred_element_type=jnp.float32)            # (HW, C)
    fdd = scale_ref[0] * o + fn_h                                       # fdotdot, h-major

    # Raw row-major reinterpretation fdd (HW, C) -> R (C, HW):
    #   R[r, b*C + d] = fdd[r*G + b, d]
    # assembled via strided sublane reads from a VMEM scratch (no value
    # reshape, which Mosaic would relayout), then one big MXU matmul.
    fdd_scr[...] = fdd
    for b in range(G):                                                  # static unroll
        r_scr[:, b * C:(b + 1) * C] = fdd_scr[pl.ds(b, C, stride=G), :]

    # c_loop = fdotdot @ reinterpret(fdotdot)  -> lane-dense (HW, HW) store.
    out_ref[...] = jnp.dot(fdd, r_scr[...], preferred_element_type=jnp.float32)


def init_params(key, in_ch):
    tc = in_ch // 8
    ks = jax.random.split(key, 6)
    s = 0.02
    return {
        # conv weights stored pre-transposed: (in_ch, out_ch) so y = x @ W + b
        "wf": s * jax.random.normal(ks[0], (in_ch, tc), jnp.float32),
        "bf": s * jax.random.normal(ks[1], (1, tc), jnp.float32),
        "wg": s * jax.random.normal(ks[2], (in_ch, tc), jnp.float32),
        "bg": s * jax.random.normal(ks[3], (1, tc), jnp.float32),
        "wh": s * jax.random.normal(ks[4], (in_ch, in_ch), jnp.float32),
        "bh": s * jax.random.normal(ks[5], (1, in_ch), jnp.float32),
        # nn.Parameter(torch.tensor(0.0)) in the module; use 0.5 (deterministic)
        # so the attention branch actually contributes to the output.
        "scale": jnp.full((1,), 0.5, jnp.float32),
    }


def scsa_forward(x, params, T):
    """x: (B, C, H, W) float32 (NCHW, like PyTorch).  Returns (B, T, H, W)."""
    B, C, H, W = x.shape
    HW = H * W
    # the in-kernel raw-reshape decomposition needs C | H*W (holds for typical shapes)
    assert HW % C == 0, "scsa_forward requires C | H*W"

    # --- glue: cross-batch per-(h,w) Frobenius norms + reciprocals (spans the
    # batch grid axis, so it cannot live inside the per-batch kernel) ---
    norm_hw = jnp.sqrt(jnp.sum(x.astype(jnp.float32) ** 2, axis=(0, 1)))   # (H, W)
    inv_nh = (1.0 / norm_hw).reshape(HW, 1)           # h-major, per-row reciprocal
    inv_nw = (1.0 / norm_hw.T).reshape(1, HW)         # w-major, lane-dense row

    # --- glue: layout plumbing NCHW -> h-major slab and w-major transposed slab ---
    xh = jnp.transpose(x, (0, 2, 3, 1)).reshape(B, HW, C)     # i = h*W + w
    xwT = jnp.transpose(x, (0, 1, 3, 2)).reshape(B, C, HW)    # j = w*H + h

    # --- glue: fold the two skinny 1x1-conv projections into one C x C matrix ---
    m_fg = params["wf"] @ params["wg"].T              # (C, C)
    v_g = params["bf"] @ params["wg"].T               # (1, C)  (only j-varying bias term)

    def full2(shape):
        return pl.BlockSpec(shape, lambda b: (0, 0))

    def per_b(shape):
        # leading batch dim squeezed out of the kernel view
        return pl.BlockSpec((None,) + shape, lambda b: (b, 0, 0))

    c_loop = pl.pallas_call(
        _scsa_kernel,
        out_shape=jax.ShapeDtypeStruct((B, HW, HW), jnp.float32),
        grid=(B,),
        in_specs=[
            per_b((HW, C)),                                        # xh
            per_b((C, HW)),                                        # xwT
            full2((HW, 1)),                                        # 1/norm, h-major
            full2((1, HW)),                                        # 1/norm, w-major
            full2((C, C)),                                         # Wf Wg^T
            full2((1, C)),                                         # bf Wg^T
            full2((C, C)),                                         # Wh
            full2((1, C)),                                         # bh
            pl.BlockSpec(memory_space=pltpu.MemorySpace.SMEM),     # scale (scalar)
        ],
        out_specs=per_b((HW, HW)),
        scratch_shapes=[
            pltpu.VMEM((HW, C), jnp.float32),   # fdotdot
            pltpu.VMEM((C, HW), jnp.float32),   # raw-reshape view of fdotdot
        ],
        compiler_params=pltpu.CompilerParams(dimension_semantics=("parallel",)),
    )(xh, xwT, inv_nh, inv_nw, m_fg, v_g, params["wh"], params["bh"], params["scale"])

    c_loop = c_loop.reshape(B, H, W, HW)
    # TODO(synk): descending sort / top-k has no clean Mosaic lowering; the
    # sort + ReLU + cross-batch normalization tail stays in plain JAX.
    vals = jax.lax.top_k(c_loop, T)[0]                      # (B, H, W, T), descending
    vals = jnp.maximum(vals, 0.0)                           # ReLU
    n2 = jnp.sqrt(jnp.sum(vals ** 2, axis=(0, 1)))          # Frobenius over (B, H) -> (W, T)
    vals = vals / n2[None, None]                            # broadcast (1, 1, W, T)
    return jnp.transpose(vals, (0, 3, 1, 2))                # (B, T, H, W)


def scsa_reference(x, params, T):
    """Pure-JAX transcription of the PyTorch forward for validation."""
    B, C, H, W = x.shape
    HW = H * W
    prec = jax.lax.Precision.HIGHEST
    norm = jnp.sqrt(jnp.sum(x ** 2, axis=(0, 1)))           # (H, W)
    xn = x / norm[None, None]
    xh = jnp.transpose(xn, (0, 2, 3, 1))                    # (B, H, W, C)
    f = jnp.einsum("bhwc,cd->bhwd", xh, params["wf"], precision=prec) + params["bf"][0]
    g = jnp.einsum("bhwc,cd->bhwd", xh, params["wg"], precision=prec) + params["bg"][0]
    h = jnp.einsum("bhwc,cd->bhwd", xh, params["wh"], precision=prec) + params["bh"][0]
    fr = f.reshape(B, HW, -1)
    gr = jnp.transpose(g, (0, 3, 2, 1)).reshape(B, -1, HW)
    s = jnp.einsum("bik,bkj->bij", fr, gr, precision=prec)
    beta = jax.nn.softmax(s, axis=-1)
    o = jnp.einsum("bij,bjc->bic", beta, h.reshape(B, HW, C), precision=prec)
    fdd = params["scale"][0] * o.reshape(B, H, W, C) + xh
    R = fdd.reshape(B, C, HW)
    cl = jnp.einsum("bhwc,bcj->bhwj", fdd, R, precision=prec)
    vals = jax.lax.top_k(cl, T)[0]
    vals = jnp.maximum(vals, 0.0)
    n2 = jnp.sqrt(jnp.sum(vals ** 2, axis=(0, 1)))
    vals = vals / n2[None, None]
    return jnp.transpose(vals, (0, 3, 1, 2))


if __name__ == "__main__":
    # in_ch=16 -> transform_ch=2; H=W=16 -> HW=256 (lane-dense output tiles)
    B, C, H, W, T = 2, 16, 16, 16, 8
    key = jax.random.PRNGKey(0)
    kx, kp = jax.random.split(key)
    x = jax.random.normal(kx, (B, C, H, W), jnp.float32)
    params = init_params(kp, C)

    out = jax.jit(functools.partial(scsa_forward, T=T))(x, params)
    jax.block_until_ready(out)
    assert out.shape == (B, T, H, W), out.shape

    ref = scsa_reference(x, params, T)
    max_err = float(jnp.max(jnp.abs(out - ref)))
    assert jnp.allclose(out, ref, atol=1e-2, rtol=1e-2), max_err

    print("KERNEL_OK")
</pallas_src>

<mosaic_0001>
module attributes {stable_mosaic.version = 11 : i64} {
  func.func @_scsa_kernel(%arg0: i32, %arg1: memref<1x256x16xf32, #tpu.memory_space<vmem>>, %arg2: memref<1x16x256xf32, #tpu.memory_space<vmem>>, %arg3: memref<256x1xf32, #tpu.memory_space<vmem>>, %arg4: memref<1x256xf32, #tpu.memory_space<vmem>>, %arg5: memref<16x16xf32, #tpu.memory_space<vmem>>, %arg6: memref<1x16xf32, #tpu.memory_space<vmem>>, %arg7: memref<16x16xf32, #tpu.memory_space<vmem>>, %arg8: memref<1x16xf32, #tpu.memory_space<vmem>>, %arg9: memref<1xf32, #tpu.memory_space<smem>>, %arg10: memref<1x256x256xf32, #tpu.memory_space<vmem>>, %arg11: memref<256x16xf32, #tpu.memory_space<vmem>>, %arg12: memref<16x256xf32, #tpu.memory_space<vmem>>) attributes {dimension_semantics = [#tpu.dimension_semantics<parallel>], iteration_bounds = array<i64: 2>, scalar_prefetch = 0 : i64, scratch_operands = 2 : i64, tpu.core_type = #tpu.core_type<tc>, window_params = [{transform_indices = @transform_0, window_bounds = array<i64: 1, 256, 16>}, {transform_indices = @transform_1, window_bounds = array<i64: 1, 16, 256>}, {pipeline_mode = #tpu.pipeline_mode<synchronous>, transform_indices = @transform_2, window_bounds = array<i64: 256, 1>}, {pipeline_mode = #tpu.pipeline_mode<synchronous>, transform_indices = @transform_3, window_bounds = array<i64: 1, 256>}, {pipeline_mode = #tpu.pipeline_mode<synchronous>, transform_indices = @transform_4, window_bounds = array<i64: 16, 16>}, {pipeline_mode = #tpu.pipeline_mode<synchronous>, transform_indices = @transform_5, window_bounds = array<i64: 1, 16>}, {pipeline_mode = #tpu.pipeline_mode<synchronous>, transform_indices = @transform_6, window_bounds = array<i64: 16, 16>}, {pipeline_mode = #tpu.pipeline_mode<synchronous>, transform_indices = @transform_7, window_bounds = array<i64: 1, 16>}, {transform_indices = @transform_8, window_bounds = array<i64: 1>}, {transform_indices = @transform_9, window_bounds = array<i64: 1, 256, 256>}]} {
    %c0 = arith.constant 0 : index
    %c0_0 = arith.constant 0 : index
    %c0_1 = arith.constant 0 : index
    %0 = vector.load %arg1[%c0, %c0_0, %c0_1] : memref<1x256x16xf32, #tpu.memory_space<vmem>>, vector<1x256x16xf32>
    %1 = vector.shape_cast %0 : vector<1x256x16xf32> to vector<256x16xf32>
    %c0_2 = arith.constant 0 : index
    %c0_3 = arith.constant 0 : index
    %2 = vector.load %arg3[%c0_2, %c0_3] : memref<256x1xf32, #tpu.memory_space<vmem>>, vector<256x1xf32>
    %3 = vector.broadcast %2 : vector<256x1xf32> to vector<256x16xf32>
    %4 = arith.mulf %1, %3 : vector<256x16xf32>
    %c0_4 = arith.constant 0 : index
    %c0_5 = arith.constant 0 : index
    %c0_6 = arith.constant 0 : index
    %5 = vector.load %arg2[%c0_4, %c0_5, %c0_6] : memref<1x16x256xf32, #tpu.memory_space<vmem>>, vector<1x16x256xf32>
    %6 = vector.shape_cast %5 : vector<1x16x256xf32> to vector<16x256xf32>
    %c0_7 = arith.constant 0 : index
    %c0_8 = arith.constant 0 : index
    %7 = vector.load %arg4[%c0_7, %c0_8] : memref<1x256xf32, #tpu.memory_space<vmem>>, vector<1x256xf32>
    %8 = vector.broadcast %7 : vector<1x256xf32> to vector<16x256xf32>
    %9 = arith.mulf %6, %8 : vector<16x256xf32>
    %c0_9 = arith.constant 0 : index
    %c0_10 = arith.constant 0 : index
    %10 = vector.load %arg5[%c0_9, %c0_10] : memref<16x16xf32, #tpu.memory_space<vmem>>, vector<16x16xf32>
    %cst = arith.constant dense<0.000000e+00> : vector<256x16xf32>
    %11 = tpu.matmul %4, %10, %cst {dimension_numbers = #tpu.dot_dimension_numbers<[1], [0], [0], [1], [0, 0, 1, 1], [], []>} : vector<256x16xf32>, vector<16x16xf32>, vector<256x16xf32> -> vector<256x16xf32>
    %c0_11 = arith.constant 0 : index
    %c0_12 = arith.constant 0 : index
    %12 = vector.load %arg6[%c0_11, %c0_12] : memref<1x16xf32, #tpu.memory_space<vmem>>, vector<1x16xf32>
    %13 = vector.broadcast %12 : vector<1x16xf32> to vector<256x16xf32>
    %14 = arith.addf %11, %13 : vector<256x16xf32>
    %cst_13 = arith.constant dense<0.000000e+00> : vector<256x256xf32>
    %15 = tpu.matmul %14, %9, %cst_13 {dimension_numbers = #tpu.dot_dimension_numbers<[1], [0], [0], [1], [0, 0, 1, 1], [], []>} : vector<256x16xf32>, vector<16x256xf32>, vector<256x256xf32> -> vector<256x256xf32>
    %c0_14 = arith.constant 0 : index
    %c0_15 = arith.constant 0 : index
    %16 = vector.load %arg7[%c0_14, %c0_15] : memref<16x16xf32, #tpu.memory_space<vmem>>, vector<16x16xf32>
    %cst_16 = arith.constant dense<0.000000e+00> : vector<256x16xf32>
    %17 = tpu.matmul %4, %16, %cst_16 {dimension_numbers = #tpu.dot_dimension_numbers<[1], [0], [0], [1], [0, 0, 1, 1], [], []>} : vector<256x16xf32>, vector<16x16xf32>, vector<256x16xf32> -> vector<256x16xf32>
    %c0_17 = arith.constant 0 : index
    %c0_18 = arith.constant 0 : index
    %18 = vector.load %arg8[%c0_17, %c0_18] : memref<1x16xf32, #tpu.memory_space<vmem>>, vector<1x16xf32>
    %19 = vector.broadcast %18 : vector<1x16xf32> to vector<256x16xf32>
    %20 = arith.addf %17, %19 : vector<256x16xf32>
    %cst_19 = arith.constant dense<0xFF800000> : vector<256xf32>
    %21 = vector.multi_reduction <maximumf>, %15, %cst_19 [1] : vector<256x256xf32> to vector<256xf32>
    %22 = vector.shape_cast %21 : vector<256xf32> to vector<256x1xf32>
    %23 = vector.broadcast %22 : vector<256x1xf32> to vector<256x256xf32>
    %24 = arith.subf %15, %23 : vector<256x256xf32>
    %25 = math.exp %24 : vector<256x256xf32>
    %cst_20 = arith.constant dense<0.000000e+00> : vector<256xf32>
    %26 = vector.multi_reduction <add>, %25, %cst_20 [1] : vector<256x256xf32> to vector<256xf32>
    %27 = vector.shape_cast %26 : vector<256xf32> to vector<256x1xf32>
    %28 = tpu.reciprocal %27 {approx = true} : vector<256x1xf32> -> vector<256x1xf32>
    %29 = vector.broadcast %28 : vector<256x1xf32> to vector<256x256xf32>
    %30 = arith.mulf %25, %29 : vector<256x256xf32>
    %cst_21 = arith.constant dense<0.000000e+00> : vector<256x16xf32>
    %31 = tpu.matmul %30, %20, %cst_21 {dimension_numbers = #tpu.dot_dimension_numbers<[1], [0], [0], [1], [0, 0, 1, 1], [], []>} : vector<256x256xf32>, vector<256x16xf32>, vector<256x16xf32> -> vector<256x16xf32>
    %c0_22 = arith.constant 0 : index
    %32 = memref.load %arg9[%c0_22] : memref<1xf32, #tpu.memory_space<smem>>
    %33 = vector.broadcast %32 : f32 to vector<256x16xf32>
    %34 = arith.mulf %33, %31 : vector<256x16xf32>
    %35 = arith.addf %34, %4 : vector<256x16xf32>
    %c0_23 = arith.constant 0 : index
    %c0_24 = arith.constant 0 : index
    %36 = vector.load %arg11[%c0_23, %c0_24] : memref<256x16xf32, #tpu.memory_space<vmem>>, vector<256x16xf32>
    tpu.vector_store %arg11[%c0_23, %c0_24], %35 {strides = array<i32>} : memref<256x16xf32, #tpu.memory_space<vmem>>, vector<256x16xf32>,
    %c0_25 = arith.constant 0 : index
    %c0_26 = arith.constant 0 : index
    %37 = tpu.strided_load %arg11[%c0_25, %c0_26] {strides = array<i32: 16, 1>} : memref<256x16xf32, #tpu.memory_space<vmem>>, vector<16x16xf32>
    %c0_27 = arith.constant 0 : index
    %c0_28 = arith.constant 0 : index
    %38 = vector.load %arg12[%c0_27, %c0_28] : memref<16x256xf32, #tpu.memory_space<vmem>>, vector<16x16xf32>
    tpu.vector_store %arg12[%c0_27, %c0_28], %37 {strides = array<i32>} : memref<16x256xf32, #tpu.memory_space<vmem>>, vector<16x16xf32>,
    %c1 = arith.constant 1 : index
    %c0_29 = arith.constant 0 : index
    %39 = tpu.strided_load %arg11[%c1, %c0_29] {strides = array<i32: 16, 1>} : memref<256x16xf32, #tpu.memory_space<vmem>>, vector<16x16xf32>
    %c0_30 = arith.constant 0 : index
    %c16 = arith.constant 16 : index
    %40 = vector.load %arg12[%c0_30, %c16] : memref<16x256xf32, #tpu.memory_space<vmem>>, vector<16x16xf32>
    tpu.vector_store %arg12[%c0_30, %c16], %39 {strides = array<i32>} : memref<16x256xf32, #tpu.memory_space<vmem>>, vector<16x16xf32>,
    %c2 = arith.constant 2 : index
    %c0_31 = arith.constant 0 : index
    %41 = tpu.strided_load %arg11[%c2, %c0_31] {strides = array<i32: 16, 1>} : memref<256x16xf32, #tpu.memory_space<vmem>>, vector<16x16xf32>
    %c0_32 = arith.constant 0 : index
    %c32 = arith.constant 32 : index
    %42 = vector.load %arg12[%c0_32, %c32] : memref<16x256xf32, #tpu.memory_space<vmem>>, vector<16x16xf32>
    tpu.vector_store %arg12[%c0_32, %c32], %41 {strides = array<i32>} : memref<16x256xf32, #tpu.memory_space<vmem>>, vector<16x16xf32>,
    %c3 = arith.constant 3 : index
    %c0_33 = arith.constant 0 : index
    %43 = tpu.strided_load %arg11[%c3, %c0_33] {strides = array<i32: 16, 1>} : memref<256x16xf32, #tpu.memory_space<vmem>>, vector<16x16xf32>
    %c0_34 = arith.constant 0 : index
    %c48 = arith.constant 48 : index
    %44 = vector.load %arg12[%c0_34, %c48] : memref<16x256xf32, #tpu.memory_space<vmem>>, vector<16x16xf32>
    tpu.vector_store %arg12[%c0_34, %c48], %43 {strides = array<i32>} : memref<16x256xf32, #tpu.memory_space<vmem>>, vector<16x16xf32>,
    %c4 = arith.constant 4 : index
    %c0_35 = arith.constant 0 : index
    %45 = tpu.strided_load %arg11[%c4, %c0_35] {strides = array<i32: 16, 1>} : memref<256x16xf32, #tpu.memory_space<vmem>>, vector<16x16xf32>
    %c0_36 = arith.constant 0 : index
    %c64 = arith.constant 64 : index
    %46 = vector.load %arg12[%c0_36, %c64] : memref<16x256xf32, #tpu.memory_space<vmem>>, vector<16x16xf32>
    tpu.vector_store %arg12[%c0_36, %c64], %45 {strides = array<i32>} : memref<16x256xf32, #tpu.memory_space<vmem>>, vector<16x16xf32>,
    %c5 = arith.constant 5 : index
    %c0_37 = arith.constant 0 : index
    %47 = tpu.strided_load %arg11[%c5, %c0_37] {strides = array<i32: 16, 1>} : memref<256x16xf32, #tpu.memory_space<vmem>>, vector<16x16xf32>
    %c0_38 = arith.constant 0 : index
    %c80 = arith.constant 80 : index
    %48 = vector.load %arg12[%c0_38, %c80] : memref<16x256xf32, #tpu.memory_space<vmem>>, vector<16x16xf32>
    tpu.vector_store %arg12[%c0_38, %c80], %47 {strides = array<i32>} : memref<16x256xf32, #tpu.memory_space<vmem>>, vector<16x16xf32>,
    %c6 = arith.constant 6 : index
    %c0_39 = arith.constant 0 : index
    %49 = tpu.strided_load %arg11[%c6, %c0_39] {strides = array<i32: 16, 1>} : memref<256x16xf32, #tpu.memory_space<vmem>>, vector<16x16xf32>
    %c0_40 = arith.constant 0 : index
    %c96 = arith.constant 96 : index
    %50 = vector.load %arg12[%c0_40, %c96] : memref<16x256xf32, #tpu.memory_space<vmem>>, vector<16x16xf32>
    tpu.vector_store %arg12[%c0_40, %c96], %49 {strides = array<i32>} : memref<16x256xf32, #tpu.memory_space<vmem>>, vector<16x16xf32>,
    %c7 = arith.constant 7 : index
    %c0_41 = arith.constant 0 : index
    %51 = tpu.strided_load %arg11[%c7, %c0_41] {strides = array<i32: 16, 1>} : memref<256x16xf32, #tpu.memory_space<vmem>>, vector<16x16xf32>
    %c0_42 = arith.constant 0 : index
    %c112 = arith.constant 112 : index
    %52 = vector.load %arg12[%c0_42, %c112] : memref<16x256xf32, #tpu.memory_space<vmem>>, vector<16x16xf32>
    tpu.vector_store %arg12[%c0_42, %c112], %51 {strides = array<i32>} : memref<16x256xf32, #tpu.memory_space<vmem>>, vector<16x16xf32>,
    %c8 = arith.constant 8 : index
    %c0_43 = arith.constant 0 : index
    %53 = tpu.strided_load %arg11[%c8, %c0_43] {strides = array<i32: 16, 1>} : memref<256x16xf32, #tpu.memory_space<vmem>>, vector<16x16xf32>
    %c0_44 = arith.constant 0 : index
    %c128 = arith.constant 128 : index
    %54 = vector.load %arg12[%c0_44, %c128] : memref<16x256xf32, #tpu.memory_space<vmem>>, vector<16x16xf32>
    tpu.vector_store %arg12[%c0_44, %c128], %53 {strides = array<i32>} : memref<16x256xf32, #tpu.memory_space<vmem>>, vector<16x16xf32>,
    %c9 = arith.constant 9 : index
    %c0_45 = arith.constant 0 : index
    %55 = tpu.strided_load %arg11[%c9, %c0_45] {strides = array<i32: 16, 1>} : memref<256x16xf32, #tpu.memory_space<vmem>>, vector<16x16xf32>
    %c0_46 = arith.constant 0 : index
    %c144 = arith.constant 144 : index
    %56 = vector.load %arg12[%c0_46, %c144] : memref<16x256xf32, #tpu.memory_space<vmem>>, vector<16x16xf32>
    tpu.vector_store %arg12[%c0_46, %c144], %55 {strides = array<i32>} : memref<16x256xf32, #tpu.memory_space<vmem>>, vector<16x16xf32>,
    %c10 = arith.constant 10 : index
    %c0_47 = arith.constant 0 : index
    %57 = tpu.strided_load %arg11[%c10, %c0_47] {strides = array<i32: 16, 1>} : memref<256x16xf32, #tpu.memory_space<vmem>>, vector<16x16xf32>
    %c0_48 = arith.constant 0 : index
    %c160 = arith.constant 160 : index
    %58 = vector.load %arg12[%c0_48, %c160] : memref<16x256xf32, #tpu.memory_space<vmem>>, vector<16x16xf32>
    tpu.vector_store %arg12[%c0_48, %c160], %57 {strides = array<i32>} : memref<16x256xf32, #tpu.memory_space<vmem>>, vector<16x16xf32>,
    %c11 = arith.constant 11 : index
    %c0_49 = arith.constant 0 : index
    %59 = tpu.strided_load %arg11[%c11, %c0_49] {strides = array<i32: 16, 1>} : memref<256x16xf32, #tpu.memory_space<vmem>>, vector<16x16xf32>
    %c0_50 = arith.constant 0 : index
    %c176 = arith.constant 176 : index
    %60 = vector.load %arg12[%c0_50, %c176] : memref<16x256xf32, #tpu.memory_space<vmem>>, vector<16x16xf32>
    tpu.vector_store %arg12[%c0_50, %c176], %59 {strides = array<i32>} : memref<16x256xf32, #tpu.memory_space<vmem>>, vector<16x16xf32>,
    %c12 = arith.constant 12 : index
    %c0_51 = arith.constant 0 : index
    %61 = tpu.strided_load %arg11[%c12, %c0_51] {strides = array<i32: 16, 1>} : memref<256x16xf32, #tpu.memory_space<vmem>>, vector<16x16xf32>
    %c0_52 = arith.constant 0 : index
    %c192 = arith.constant 192 : index
    %62 = vector.load %arg12[%c0_52, %c192] : memref<16x256xf32, #tpu.memory_space<vmem>>, vector<16x16xf32>
    tpu.vector_store %arg12[%c0_52, %c192], %61 {strides = array<i32>} : memref<16x256xf32, #tpu.memory_space<vmem>>, vector<16x16xf32>,
    %c13 = arith.constant 13 : index
    %c0_53 = arith.constant 0 : index
    %63 = tpu.strided_load %arg11[%c13, %c0_53] {strides = array<i32: 16, 1>} : memref<256x16xf32, #tpu.memory_space<vmem>>, vector<16x16xf32>
    %c0_54 = arith.constant 0 : index
    %c208 = arith.constant 208 : index
    %64 = vector.load %arg12[%c0_54, %c208] : memref<16x256xf32, #tpu.memory_space<vmem>>, vector<16x16xf32>
    tpu.vector_store %arg12[%c0_54, %c208], %63 {strides = array<i32>} : memref<16x256xf32, #tpu.memory_space<vmem>>, vector<16x16xf32>,
    %c14 = arith.constant 14 : index
    %c0_55 = arith.constant 0 : index
    %65 = tpu.strided_load %arg11[%c14, %c0_55] {strides = array<i32: 16, 1>} : memref<256x16xf32, #tpu.memory_space<vmem>>, vector<16x16xf32>
    %c0_56 = arith.constant 0 : index
    %c224 = arith.constant 224 : index
    %66 = vector.load %arg12[%c0_56, %c224] : memref<16x256xf32, #tpu.memory_space<vmem>>, vector<16x16xf32>
    tpu.vector_store %arg12[%c0_56, %c224], %65 {strides = array<i32>} : memref<16x256xf32, #tpu.memory_space<vmem>>, vector<16x16xf32>,
    %c15 = arith.constant 15 : index
    %c0_57 = arith.constant 0 : index
    %67 = tpu.strided_load %arg11[%c15, %c0_57] {strides = array<i32: 16, 1>} : memref<256x16xf32, #tpu.memory_space<vmem>>, vector<16x16xf32>
    %c0_58 = arith.constant 0 : index
    %c240 = arith.constant 240 : index
    %68 = vector.load %arg12[%c0_58, %c240] : memref<16x256xf32, #tpu.memory_space<vmem>>, vector<16x16xf32>
    tpu.vector_store %arg12[%c0_58, %c240], %67 {strides = array<i32>} : memref<16x256xf32, #tpu.memory_space<vmem>>, vector<16x16xf32>,
    %c0_59 = arith.constant 0 : index
    %c0_60 = arith.constant 0 : index
    %69 = vector.load %arg12[%c0_59, %c0_60] : memref<16x256xf32, #tpu.memory_space<vmem>>, vector<16x256xf32>
    %cst_61 = arith.constant dense<0.000000e+00> : vector<256x256xf32>
    %70 = tpu.matmul %35, %69, %cst_61 {dimension_numbers = #tpu.dot_dimension_numbers<[1], [0], [0], [1], [0, 0, 1, 1], [], []>} : vector<256x16xf32>, vector<16x256xf32>, vector<256x256xf32> -> vector<256x256xf32>
    %c0_62 = arith.constant 0 : index
    %c0_63 = arith.constant 0 : index
    %c0_64 = arith.constant 0 : index
    %71 = vector.load %arg10[%c0_62, %c0_63, %c0_64] : memref<1x256x256xf32, #tpu.memory_space<vmem>>, vector<1x256x256xf32>
    %72 = vector.shape_cast %71 : vector<1x256x256xf32> to vector<256x256xf32>
    %73 = vector.shape_cast %70 : vector<256x256xf32> to vector<1x256x256xf32>
    tpu.vector_store %arg10[%c0_62, %c0_63, %c0_64], %73 {strides = array<i32>} : memref<1x256x256xf32, #tpu.memory_space<vmem>>, vector<1x256x256xf32>,
    return
  }
  func.func @transform_0(%arg0: i32) -> (i32, i32, i32) {
    %c0_i32 = arith.constant 0 : i32
    %c0_i32_0 = arith.constant 0 : i32
    %c0_i32_1 = arith.constant 0 : i32
    return %arg0, %c0_i32, %c0_i32_0 : i32, i32, i32
  }
  func.func @transform_1(%arg0: i32) -> (i32, i32, i32) {
    %c0_i32 = arith.constant 0 : i32
    %c0_i32_0 = arith.constant 0 : i32
    %c0_i32_1 = arith.constant 0 : i32
    return %arg0, %c0_i32, %c0_i32_0 : i32, i32, i32
  }
  func.func @transform_2(%arg0: i32) -> (i32, i32) {
    %c0_i32 = arith.constant 0 : i32
    %c0_i32_0 = arith.constant 0 : i32
    %c0_i32_1 = arith.constant 0 : i32
    return %c0_i32, %c0_i32_0 : i32, i32
  }
  func.func @transform_3(%arg0: i32) -> (i32, i32) {
    %c0_i32 = arith.constant 0 : i32
    %c0_i32_0 = arith.constant 0 : i32
    %c0_i32_1 = arith.constant 0 : i32
    return %c0_i32, %c0_i32_0 : i32, i32
  }
  func.func @transform_4(%arg0: i32) -> (i32, i32) {
    %c0_i32 = arith.constant 0 : i32
    %c0_i32_0 = arith.constant 0 : i32
    %c0_i32_1 = arith.constant 0 : i32
    return %c0_i32, %c0_i32_0 : i32, i32
  }
  func.func @transform_5(%arg0: i32) -> (i32, i32) {
    %c0_i32 = arith.constant 0 : i32
    %c0_i32_0 = arith.constant 0 : i32
    %c0_i32_1 = arith.constant 0 : i32
    return %c0_i32, %c0_i32_0 : i32, i32
  }
  func.func @transform_6(%arg0: i32) -> (i32, i32) {
    %c0_i32 = arith.constant 0 : i32
    %c0_i32_0 = arith.constant 0 : i32
    %c0_i32_1 = arith.constant 0 : i32
    return %c0_i32, %c0_i32_0 : i32, i32
  }
  func.func @transform_7(%arg0: i32) -> (i32, i32) {
    %c0_i32 = arith.constant 0 : i32
    %c0_i32_0 = arith.constant 0 : i32
    %c0_i32_1 = arith.constant 0 : i32
    return %c0_i32, %c0_i32_0 : i32, i32
  }
  func.func @transform_8(%arg0: i32) -> i32 {
    %c0_i32 = arith.constant 0 : i32
    %c0_i32_0 = arith.constant 0 : i32
    return %c0_i32 : i32
  }
  func.func @transform_9(%arg0: i32) -> (i32, i32, i32) {
    %c0_i32 = arith.constant 0 : i32
    %c0_i32_0 = arith.constant 0 : i32
    %c0_i32_1 = arith.constant 0 : i32
    return %arg0, %c0_i32, %c0_i32_0 : i32, i32, i32
  }
}

</mosaic_0001>

<llo_original>
// kernel: scsa_forward.1
$region0: #{scsa_forward.1}
  #allocation0 [shape = 'u32[]', space=smem, size = 0x4, offset = 0x4, fixed_abs, tag = 'smem constant byte address 0x4 - core index']
  #allocation1 [shape = 'u32[72,128]{1,0:T(1,128)}', space=vmem, size = 0x9000, scoped, tag = 'internal scratch']
  #allocation2 [shape = 'f32[256,16]{1,0:T(8,128)}', space=vmem, size = 0x20000, scoped, tag = 'scratch operand']
  #allocation3 [shape = 'f32[16,256]{1,0:T(8,128)}', space=vmem, size = 0x4000, scoped, tag = 'scratch operand']
  #allocation4 [shape = 'f32[1]{0:T(128)S(6)}', space=smem, size = 0x200, scoped, tag = 'scoped memory for scsa_forward.1']
  %s0 = inlined_call_operand.vmem [shape: f32[2,256,16], index: 0, kind: input, shape index: {}]
  %s1 = inlined_call_operand.vmem [shape: f32[2,16,256], index: 1, kind: input, shape index: {}]
  %s2 = inlined_call_operand.vmem [shape: f32[256,1], index: 2, kind: input, shape index: {}]
  %s3 = inlined_call_operand.vmem [shape: f32[1,256], index: 3, kind: input, shape index: {}]
  %s4 = inlined_call_operand.vmem [shape: f32[16,16], index: 4, kind: input, shape index: {}]
  %s5 = inlined_call_operand.vmem [shape: f32[1,16], index: 5, kind: input, shape index: {}]
  %s6 = inlined_call_operand.vmem [shape: f32[16,16], index: 6, kind: input, shape index: {}]
  %s7 = inlined_call_operand.vmem [shape: f32[1,16], index: 7, kind: input, shape index: {}]
  %s8 = inlined_call_operand.<no memory space> [shape: f32[1], index: 8, kind: input, shape index: {}]
  %s9 = inlined_call_operand.vmem [shape: f32[2,256,256], index: 9, kind: output, shape index: {}]
  %s10 = sld [smem:[#allocation0]]
  $region69: #{scsa_forward.1} parent=0
    _
  %s12 = ssub.s32 1, %s10
  %s13 = scalar_select 0, %s12, %s10
  %14 = sst [smem:[#allocation4]] %s8
  loop: start=0, step=1, limit=4
  $region2: #{scsa_forward.1} parent=0 // loop_pre_header
    _
  $region3: #{scsa_forward.1} parent=0 // loop_header
    %s16 = sphi 0, %s20
    %p17 = scmp.ge.s32.totalorder %s16, 4
    %s26 = sphi 0, %s28
    %s29 = sphi 0, %s26
    %s30 = sphi 0, %s29
    %s46 = sphi 0, %s30
    %s52 = sphi 0, %s54
    %s55 = sphi 0, %s52
    %s56 = sphi 0, %s55
    %s72 = sphi 0, %s56
    %s76 = sphi 0, %s76
    %s78 = sphi 0, %s76
    %s79 = sphi 0, %s78
    %s93 = sphi 0, %s79
    %s97 = sphi 0, %s97
    %s99 = sphi 0, %s97
    %s100 = sphi 0, %s99
    %s114 = sphi 0, %s100
    %s118 = sphi 0, %s118
    %s120 = sphi 0, %s118
    %s121 = sphi 0, %s120
    %s135 = sphi 0, %s121
    %s139 = sphi 0, %s139
    %s141 = sphi 0, %s139
    %s142 = sphi 0, %s141
    %s156 = sphi 0, %s142
    %s160 = sphi 0, %s160
    %s162 = sphi 0, %s160
    %s163 = sphi 0, %s162
    %s177 = sphi 0, %s163
    %s181 = sphi 0, %s181
    %s183 = sphi 0, %s181
    %s184 = sphi 0, %s183
    %s198 = sphi 0, %s184
    %s202 = sphi 0, %s202
    %s204 = sphi 0, %s202
    %s205 = sphi 0, %s204
    %s219 = sphi 0, %s205
    %s225 = sphi 0, %s227
    %s228 = sphi 0, %s225
    %s229 = sphi 0, %s228
    %s245 = sphi 0, %s229
  $region4: #{scsa_forward.1} parent=0 // loop_header_branch
    %19 = sbr.rel (%p17) target = $region8
  $region5: #{scsa_forward.1} parent=0 // loop_body
    %s21 = ssub.s32 %s16, 1
    %s22 = ssub.s32 %s16, 2
    %s23 = sadd.s32 %s16, 1
    %s24 = ssub.s32 %s16, %s23
    %p25 = scmp.eq.s32.totalorder %s24, 0
    %s27 = sadd.s32 %s26, 1
    %s28 = scalar_select %p25, %s26, %s27
    %p31 = pneg %p25
    %p32 = scmp.eq.s32.totalorder %s16, 1
    %p33 = por %p31, %p32
    %p34 = scmp.ne.s32.totalorder %s26, %s29
    %p35 = scmp.eq.s32.totalorder %s16, 0
    %p36 = por %p34, %p35
    %p37 = scmp.ne.s32.totalorder %s26, %s29
    %p38 = scmp.eq.s32.totalorder %s21, 1
    %p39 = por %p37, %p38
    %p40 = scmp.ne.s32.totalorder %s29, %s30
    %p41 = scmp.eq.s32.totalorder %s21, 0
    %p42 = por %p40, %p41
    %p43 = scmp.ne.s32.totalorder %s29, %s30
    %p44 = scmp.eq.s32.totalorder %s22, 1
    %p45 = por %p43, %p44
    %p47 = scmp.ne.s32.totalorder %s30, %s46
    %p48 = scmp.eq.s32.totalorder %s22, 0
    %p49 = por %p47, %p48
    %s50 = ssub.s32 %s16, %s23
    %p51 = scmp.eq.s32.totalorder %s50, 0
    %s53 = sadd.s32 %s52, 1
    %s54 = scalar_select %p51, %s52, %s53
    %p57 = pneg %p51
    %p58 = scmp.eq.s32.totalorder %s16, 1
    %p59 = por %p57, %p58
    %p60 = scmp.ne.s32.totalorder %s52, %s55
    %p61 = scmp.eq.s32.totalorder %s16, 0
    %p62 = por %p60, %p61
    %p63 = scmp.ne.s32.totalorder %s52, %s55
    %p64 = scmp.eq.s32.totalorder %s21, 1
    %p65 = por %p63, %p64
    %p66 = scmp.ne.s32.totalorder %s55, %s56
    %p67 = scmp.eq.s32.totalorder %s21, 0
    %p68 = por %p66, %p67
    %p69 = scmp.ne.s32.totalorder %s55, %s56
    %p70 = scmp.eq.s32.totalorder %s22, 1
    %p71 = por %p69, %p70
    %p73 = scmp.ne.s32.totalorder %s56, %s72
    %p74 = scmp.eq.s32.totalorder %s22, 0
    %p75 = por %p73, %p74
    %s77 = sadd.s32 %s76, 1
    %p80 = scmp.eq.s32.totalorder %s16, 1
    %p81 = scmp.ne.s32.totalorder %s76, %s78
    %p82 = scmp.eq.s32.totalorder %s16, 0
    %p83 = por %p81, %p82
    %p84 = scmp.ne.s32.totalorder %s76, %s78
    %p85 = scmp.eq.s32.totalorder %s21, 1
    %p86 = por %p84, %p85
    %p87 = scmp.ne.s32.totalorder %s78, %s79
    %p88 = scmp.eq.s32.totalorder %s21, 0
    %p89 = por %p87, %p88
    %p90 = scmp.ne.s32.totalorder %s78, %s79
    %p91 = scmp.eq.s32.totalorder %s22, 1
    %p92 = por %p90, %p91
    %p94 = scmp.ne.s32.totalorder %s79, %s93
    %p95 = scmp.eq.s32.totalorder %s22, 0
    %p96 = por %p94, %p95
    %s98 = sadd.s32 %s97, 1
    %p101 = scmp.eq.s32.totalorder %s16, 1
    %p102 = scmp.ne.s32.totalorder %s97, %s99
    %p103 = scmp.eq.s32.totalorder %s16, 0
    %p104 = por %p102, %p103
    %p105 = scmp.ne.s32.totalorder %s97, %s99
    %p106 = scmp.eq.s32.totalorder %s21, 1
    %p107 = por %p105, %p106
    %p108 = scmp.ne.s32.totalorder %s99, %s100
    %p109 = scmp.eq.s32.totalorder %s21, 0
    %p110 = por %p108, %p109
    %p111 = scmp.ne.s32.totalorder %s99, %s100
    %p112 = scmp.eq.s32.totalorder %s22, 1
    %p113 = por %p111, %p112
    %p115 = scmp.ne.s32.totalorder %s100, %s114
    %p116 = scmp.eq.s32.totalorder %s22, 0
    %p117 = por %p115, %p116
    %s119 = sadd.s32 %s118, 1
    %p122 = scmp.eq.s32.totalorder %s16, 1
    %p123 = scmp.ne.s32.totalorder %s118, %s120
    %p124 = scmp.eq.s32.totalorder %s16, 0
    %p125 = por %p123, %p124
    %p126 = scmp.ne.s32.totalorder %s118, %s120
    %p127 = scmp.eq.s32.totalorder %s21, 1
    %p128 = por %p126, %p127
    %p129 = scmp.ne.s32.totalorder %s120, %s121
    %p130 = scmp.eq.s32.totalorder %s21, 0
    %p131 = por %p129, %p130
    %p132 = scmp.ne.s32.totalorder %s120, %s121
    %p133 = scmp.eq.s32.totalorder %s22, 1
    %p134 = por %p132, %p133
    %p136 = scmp.ne.s32.totalorder %s121, %s135
    %p137 = scmp.eq.s32.totalorder %s22, 0
    %p138 = por %p136, %p137
    %s140 = sadd.s32 %s139, 1
    %p143 = scmp.eq.s32.totalorder %s16, 1
    %p144 = scmp.ne.s32.totalorder %s139, %s141
    %p145 = scmp.eq.s32.totalorder %s16, 0
    %p146 = por %p144, %p145
    %p147 = scmp.ne.s32.totalorder %s139, %s141
    %p148 = scmp.eq.s32.totalorder %s21, 1
    %p149 = por %p147, %p148
    %p150 = scmp.ne.s32.totalorder %s141, %s142
    %p151 = scmp.eq.s32.totalorder %s21, 0
    %p152 = por %p150, %p151
    %p153 = scmp.ne.s32.totalorder %s141, %s142
    %p154 = scmp.eq.s32.totalorder %s22, 1
    %p155 = por %p153, %p154
    %p157 = scmp.ne.s32.totalorder %s142, %s156
    %p158 = scmp.eq.s32.totalorder %s22, 0
    %p159 = por %p157, %p158
    %s161 = sadd.s32 %s160, 1
    %p164 = scmp.eq.s32.totalorder %s16, 1
    %p165 = scmp.ne.s32.totalorder %s160, %s162
    %p166 = scmp.eq.s32.totalorder %s16, 0
    %p167 = por %p165, %p166
    %p168 = scmp.ne.s32.totalorder %s160, %s162
    %p169 = scmp.eq.s32.totalorder %s21, 1
    %p170 = por %p168, %p169
    %p171 = scmp.ne.s32.totalorder %s162, %s163
    %p172 = scmp.eq.s32.totalorder %s21, 0
    %p173 = por %p171, %p172
    %p174 = scmp.ne.s32.totalorder %s162, %s163
    %p175 = scmp.eq.s32.totalorder %s22, 1
    %p176 = por %p174, %p175
    %p178 = scmp.ne.s32.totalorder %s163, %s177
    %p179 = scmp.eq.s32.totalorder %s22, 0
    %p180 = por %p178, %p179
    %s182 = sadd.s32 %s181, 1
    %p185 = scmp.eq.s32.totalorder %s16, 1
    %p186 = scmp.ne.s32.totalorder %s181, %s183
    %p187 = scmp.eq.s32.totalorder %s16, 0
    %p188 = por %p186, %p187
    %p189 = scmp.ne.s32.totalorder %s181, %s183
    %p190 = scmp.eq.s32.totalorder %s21, 1
    %p191 = por %p189, %p190
    %p192 = scmp.ne.s32.totalorder %s183, %s184
    %p193 = scmp.eq.s32.totalorder %s21, 0
    %p194 = por %p192, %p193
    %p195 = scmp.ne.s32.totalorder %s183, %s184
    %p196 = scmp.eq.s32.totalorder %s22, 1
    %p197 = por %p195, %p196
    %p199 = scmp.ne.s32.totalorder %s184, %s198
    %p200 = scmp.eq.s32.totalorder %s22, 0
    %p201 = por %p199, %p200
    %s203 = sadd.s32 %s202, 1
    %p206 = scmp.eq.s32.totalorder %s16, 1
    %p207 = scmp.ne.s32.totalorder %s202, %s204
    %p208 = scmp.eq.s32.totalorder %s16, 0
    %p209 = por %p207, %p208
    %p210 = scmp.ne.s32.totalorder %s202, %s204
    %p211 = scmp.eq.s32.totalorder %s21, 1
    %p212 = por %p210, %p211
    %p213 = scmp.ne.s32.totalorder %s204, %s205
    %p214 = scmp.eq.s32.totalorder %s21, 0
    %p215 = por %p213, %p214
    %p216 = scmp.ne.s32.totalorder %s204, %s205
    %p217 = scmp.eq.s32.totalorder %s22, 1
    %p218 = por %p216, %p217
    %p220 = scmp.ne.s32.totalorder %s205, %s219
    %p221 = scmp.eq.s32.totalorder %s22, 0
    %p222 = por %p220, %p221
    %s223 = ssub.s32 %s16, %s23
    %p224 = scmp.eq.s32.totalorder %s223, 0
    %s226 = sadd.s32 %s225, 1
    %s227 = scalar_select %p224, %s225, %s226
    %p230 = pneg %p224
    %p231 = scmp.eq.s32.totalorder %s16, 1
    %p232 = por %p230, %p231
    %p233 = scmp.ne.s32.totalorder %s225, %s228
    %p234 = scmp.eq.s32.totalorder %s16, 0
    %p235 = por %p233, %p234
    %p236 = scmp.ne.s32.totalorder %s225, %s228
    %p237 = scmp.eq.s32.totalorder %s21, 1
    %p238 = por %p236, %p237
    %p239 = scmp.ne.s32.totalorder %s228, %s229
    %p240 = scmp.eq.s32.totalorder %s21, 0
    %p241 = por %p239, %p240
    %p242 = scmp.ne.s32.totalorder %s228, %s229
    %p243 = scmp.eq.s32.totalorder %s22, 1
    %p244 = por %p242, %p243
    %p246 = scmp.ne.s32.totalorder %s229, %s245
    %p247 = scmp.eq.s32.totalorder %s22, 0
    %p248 = por %p246, %p247
    %p249 = scmp.le.s32.totalorder 1, %s16
    %p250 = scmp.lt.s32.totalorder %s16, 3
    %p251 = pnand %p249, %p250
    %p252 = pneg %p251
    // Predicated region
    $region9: #{scsa_forward.1} parent=5 // pred_check
      _
    $region10: #{scsa_forward.1} parent=5 // pred_check_branch
      %254 = sbr.rel (%p251) target = $region12
    $region11: #{scsa_forward.1} parent=5 // pred_region
      %s255 = ssub.s32 %s16, 1
      // Predicated region
      $region13: #{scsa_forward.1} parent=11 // pred_check
        %p256 = pneg %p89
      $region14: #{scsa_forward.1} parent=11 // pred_check_branch
        %258 = sbr.rel (%p256) target = $region16
      $region15: #{scsa_forward.1} parent=11 // pred_region
        _
      $region16: #{scsa_forward.1} parent=11 // pred_fallthru
        _
      // Predicated region
      $region17: #{scsa_forward.1} parent=11 // pred_check
        %p259 = pneg %p110
      $region18: #{scsa_forward.1} parent=11 // pred_check_branch
        %261 = sbr.rel (%p259) target = $region20
      $region19: #{scsa_forward.1} parent=11 // pred_region
        _
      $region20: #{scsa_forward.1} parent=11 // pred_fallthru
        _
      // Predicated region
      $region21: #{scsa_forward.1} parent=11 // pred_check
        %p262 = pneg %p131
      $region22: #{scsa_forward.1} parent=11 // pred_check_branch
        %264 = sbr.rel (%p262) target = $region24
      $region23: #{scsa_forward.1} parent=11 // pred_region
        _
      $region24: #{scsa_forward.1} parent=11 // pred_fallthru
        _
      // Predicated region
      $region25: #{scsa_forward.1} parent=11 // pred_check
        %p265 = pneg %p152
      $region26: #{scsa_forward.1} parent=11 // pred_check_branch
        %267 = sbr.rel (%p265) target = $region28
      $region27: #{scsa_forward.1} parent=11 // pred_region
        _
      $region28: #{scsa_forward.1} parent=11 // pred_fallthru
        _
      // Predicated region
      $region29: #{scsa_forward.1} parent=11 // pred_check
        %p268 = pneg %p173
      $region30: #{scsa_forward.1} parent=11 // pred_check_branch
        %270 = sbr.rel (%p268) target = $region32
      $region31: #{scsa_forward.1} parent=11 // pred_region
        _
      $region32: #{scsa_forward.1} parent=11 // pred_fallthru
        _
      // Predicated region
      $region33: #{scsa_forward.1} parent=11 // pred_check
        %p271 = pneg %p194
      $region34: #{scsa_forward.1} parent=11 // pred_check_branch
        %273 = sbr.rel (%p271) target = $region36
      $region35: #{scsa_forward.1} parent=11 // pred_region
        _
      $region36: #{scsa_forward.1} parent=11 // pred_fallthru
        _
      // Predicated region
      $region37: #{scsa_forward.1} parent=11 // pred_check
        %p274 = pneg %p215
      $region38: #{scsa_forward.1} parent=11 // pred_check_branch
        %276 = sbr.rel (%p274) target = $region40
      $region39: #{scsa_forward.1} parent=11 // pred_region
        _
      $region40: #{scsa_forward.1} parent=11 // pred_fallthru
        _
    $region12: #{scsa_forward.1} parent=5 // pred_fallthru
      _
    %p277 = scmp.lt.s32.totalorder %s16, 2
    // Predicated region
    $region41: #{scsa_forward.1} parent=5 // pred_check
      %p278 = pneg %p277
    $region42: #{scsa_forward.1} parent=5 // pred_check_branch
      %280 = sbr.rel (%p278) target = $region44
    $region43: #{scsa_forward.1} parent=5 // pred_region
      // Predicated region
      $region45: #{scsa_forward.1} parent=43 // pred_check
        %p281 = pneg %p36
      $region46: #{scsa_forward.1} parent=43 // pred_check_branch
        %283 = sbr.rel (%p281) target = $region48
      $region47: #{scsa_forward.1} parent=43 // pred_region
        %p284 = scmp.lt.s32.totalorder %s16, 1
        %s285 = scalar_select %p284, %s16, 1
        %s286 = smul.addr %s285, 32
        %s287 = smul.addr %s286, 8
        %s288 = scalar_lea.vmem %s0, %s287
      $region48: #{scsa_forward.1} parent=43 // pred_fallthru
        _
      // Predicated region
      $region49: #{scsa_forward.1} parent=43 // pred_check
        %p289 = pneg %p62
      $region50: #{scsa_forward.1} parent=43 // pred_check_branch
        %291 = sbr.rel (%p289) target = $region52
      $region51: #{scsa_forward.1} parent=43 // pred_region
        %p292 = scmp.lt.s32.totalorder %s16, 1
        %s293 = scalar_select %p292, %s16, 1
        %s294 = smul.addr %s293, 4
        %s295 = smul.addr %s294, 8
        %s296 = scalar_lea.vmem %s1, %s295
      $region52: #{scsa_forward.1} parent=43 // pred_fallthru
        _
    $region44: #{scsa_forward.1} parent=5 // pred_fallthru
      _
    %p297 = scmp.le.s32.totalorder 1, %s16
    %p298 = scmp.lt.s32.totalorder %s16, 3
    %p299 = pnand %p297, %p298
    %p300 = pneg %p299
    // Predicated region
    $region53: #{scsa_forward.1} parent=5 // pred_check
      _
    $region54: #{scsa_forward.1} parent=5 // pred_check_branch
      %302 = sbr.rel (%p299) target = $region56
    $region55: #{scsa_forward.1} parent=5 // pred_region
      %s303 = ssub.s32 %s16, 1
      %p304 = scmp.lt.s32.totalorder %s21, 1
      %s305 = scalar_select %p304, %s21, 1
      %s306 = smul.addr %s305, 32
      %s307 = smul.addr %s306, 8
      %s308 = scalar_lea.vmem %s0, %s307
      %p309 = pneg %p42
      %p310 = pneg %p39
      %p311 = scmp.lt.s32.totalorder %s21, 1
      %s312 = scalar_select %p311, %s21, 1
      %s313 = smul.addr %s312, 4
      %s314 = smul.addr %s313, 8
      %s315 = scalar_lea.vmem %s1, %s314
      %p316 = pneg %p68
      %p317 = pneg %p65
      %p318 = pneg %p89
      %p319 = pneg %p86
      %p320 = pneg %p110
      %p321 = pneg %p107
      %p322 = pneg %p131
      %p323 = pneg %p128
      %p324 = pneg %p152
      %p325 = pneg %p149
      %p326 = pneg %p173
      %p327 = pneg %p170
      %p328 = pneg %p194
      %p329 = pneg %p191
      %p330 = pneg %p215
      %p331 = pneg %p212
      %p332 = pneg %p241
      %p333 = pneg %p238
      %p334 = scmp.lt.s32.totalorder %s21, 1
      %s335 = scalar_select %p334, %s21, 1
      %s336 = smul.addr %s335, 64
      %s337 = smul.addr %s336, 8
      %s338 = scalar_lea.vmem %s9, %s337
      %p339 = scmp.lt.s32.totalorder %s21, 1
      %s340 = scalar_select %p339, %s21, 1
      %s341 = smul.addr %s340, 32
      %s342 = smul.addr %s341, 8
      %s343 = scalar_lea.vmem %s0, %s342
      %p344 = scmp.lt.s32.totalorder %s21, 1
      %s345 = scalar_select %p344, %s21, 1
      %s346 = smul.addr %s345, 4
      %s347 = smul.addr %s346, 8
      %s348 = scalar_lea.vmem %s1, %s347
      %p349 = scmp.lt.s32.totalorder %s21, 1
      %s350 = scalar_select %p349, %s21, 1
      %s351 = smul.addr %s350, 64
      %s352 = smul.addr %s351, 8
      %s353 = scalar_lea.vmem %s9, %s352
      %v354 = vld [vmem:[%s343] sm:$0xff]
      %v355 = vld [vmem:[%s343 + $0x8] sm:$0xff]
      %v356 = vld [vmem:[%s343 + $0x10] sm:$0xff]
      %v357 = vld [vmem:[%s343 + $0x18] sm:$0xff]
      %v358 = vld [vmem:[%s343 + $0x20] sm:$0xff]
      %v359 = vld [vmem:[%s343 + $0x28] sm:$0xff]
      %v360 = vld [vmem:[%s343 + $0x30] sm:$0xff]
      %v361 = vld [vmem:[%s343 + $0x38] sm:$0xff]
      %v362 = vld [vmem:[%s343 + $0x40] sm:$0xff]
      %v363 = vld [vmem:[%s343 + $0x48] sm:$0xff]
      %v364 = vld [vmem:[%s343 + $0x50] sm:$0xff]
      %v365 = vld [vmem:[%s343 + $0x58] sm:$0xff]
      %v366 = vld [vmem:[%s343 + $0x60] sm:$0xff]
      %v367 = vld [vmem:[%s343 + $0x68] sm:$0xff]
      %v368 = vld [vmem:[%s343 + $0x70] sm:$0xff]
      %v369 = vld [vmem:[%s343 + $0x78] sm:$0xff]
      %v370 = vld [vmem:[%s343 + $0x80] sm:$0xff]
      %v371 = vld [vmem:[%s343 + $0x88] sm:$0xff]
      %v372 = vld [vmem:[%s343 + $0x90] sm:$0xff]
      %v373 = vld [vmem:[%s343 + $0x98] sm:$0xff]
      %v374 = vld [vmem:[%s343 + $0xa0] sm:$0xff]
      %v375 = vld [vmem:[%s343 + $0xa8] sm:$0xff]
      %v376 = vld [vmem:[%s343 + $0xb0] sm:$0xff]
      %v377 = vld [vmem:[%s343 + $0xb8] sm:$0xff]
      %v378 = vld [vmem:[%s343 + $0xc0] sm:$0xff]
      %v379 = vld [vmem:[%s343 + $0xc8] sm:$0xff]
      %v380 = vld [vmem:[%s343 + $0xd0] sm:$0xff]
      %v381 = vld [vmem:[%s343 + $0xd8] sm:$0xff]
      %v382 = vld [vmem:[%s343 + $0xe0] sm:$0xff]
      %v383 = vld [vmem:[%s343 + $0xe8] sm:$0xff]
      %v384 = vld [vmem:[%s343 + $0xf0] sm:$0xff]
      %v385 = vld [vmem:[%s343 + $0xf8] sm:$0xff]
      %v386 = vld [vmem:[%s2] sm:$0xff]
      %v387 = vld [vmem:[%s2 + $0x8] sm:$0xff]
      %v388 = vld [vmem:[%s2 + $0x10] sm:$0xff]
      %v389 = vld [vmem:[%s2 + $0x18] sm:$0xff]
      %v390 = vld [vmem:[%s2 + $0x20] sm:$0xff]
      %v391 = vld [vmem:[%s2 + $0x28] sm:$0xff]
      %v392 = vld [vmem:[%s2 + $0x30] sm:$0xff]
      %v393 = vld [vmem:[%s2 + $0x38] sm:$0xff]
      %v394 = vld [vmem:[%s2 + $0x40] sm:$0xff]
      %v395 = vld [vmem:[%s2 + $0x48] sm:$0xff]
      %v396 = vld [vmem:[%s2 + $0x50] sm:$0xff]
      %v397 = vld [vmem:[%s2 + $0x58] sm:$0xff]
      %v398 = vld [vmem:[%s2 + $0x60] sm:$0xff]
      %v399 = vld [vmem:[%s2 + $0x68] sm:$0xff]
      %v400 = vld [vmem:[%s2 + $0x70] sm:$0xff]
      %v401 = vld [vmem:[%s2 + $0x78] sm:$0xff]
      %v402 = vld [vmem:[%s2 + $0x80] sm:$0xff]
      %v403 = vld [vmem:[%s2 + $0x88] sm:$0xff]
      %v404 = vld [vmem:[%s2 + $0x90] sm:$0xff]
      %v405 = vld [vmem:[%s2 + $0x98] sm:$0xff]
      %v406 = vld [vmem:[%s2 + $0xa0] sm:$0xff]
      %v407 = vld [vmem:[%s2 + $0xa8] sm:$0xff]
      %v408 = vld [vmem:[%s2 + $0xb0] sm:$0xff]
      %v409 = vld [vmem:[%s2 + $0xb8] sm:$0xff]
      %v410 = vld [vmem:[%s2 + $0xc0] sm:$0xff]
      %v411 = vld [vmem:[%s2 + $0xc8] sm:$0xff]
      %v412 = vld [vmem:[%s2 + $0xd0] sm:$0xff]
      %v413 = vld [vmem:[%s2 + $0xd8] sm:$0xff]
      %v414 = vld [vmem:[%s2 + $0xe0] sm:$0xff]
      %v415 = vld [vmem:[%s2 + $0xe8] sm:$0xff]
      %v416 = vld [vmem:[%s2 + $0xf0] sm:$0xff]
      %v417 = vld [vmem:[%s2 + $0xf8] sm:$0xff]
      %419 = vset.pattern.permute.xlu0 0
      %420 = vperm.xlu0 %419, %v386
      %v421 = vpop.permute.xlu0 %420
      %424 = vset.pattern.permute.xlu0 0
      %425 = vperm.xlu0 %424, %v387
      %v426 = vpop.permute.xlu0 %425
      %429 = vset.pattern.permute.xlu0 0
      %430 = vperm.xlu0 %429, %v388
      %v431 = vpop.permute.xlu0 %430
      %434 = vset.pattern.permute.xlu0 0
      %435 = vperm.xlu0 %434, %v389
      %v436 = vpop.permute.xlu0 %435
      %439 = vset.pattern.permute.xlu0 0
      %440 = vperm.xlu0 %439, %v390
      %v441 = vpop.permute.xlu0 %440
      %444 = vset.pattern.permute.xlu0 0
      %445 = vperm.xlu0 %444, %v391
      %v446 = vpop.permute.xlu0 %445
      %449 = vset.pattern.permute.xlu0 0
      %450 = vperm.xlu0 %449, %v392
      %v451 = vpop.permute.xlu0 %450
      %454 = vset.pattern.permute.xlu0 0
      %455 = vperm.xlu0 %454, %v393
      %v456 = vpop.permute.xlu0 %455
      %459 = vset.pattern.permute.xlu0 0
      %460 = vperm.xlu0 %459, %v394
      %v461 = vpop.permute.xlu0 %460
      %464 = vset.pattern.permute.xlu0 0
      %465 = vperm.xlu0 %464, %v395
      %v466 = vpop.permute.xlu0 %465
      %469 = vset.pattern.permute.xlu0 0
      %470 = vperm.xlu0 %469, %v396
      %v471 = vpop.permute.xlu0 %470
      %474 = vset.pattern.permute.xlu0 0
      %475 = vperm.xlu0 %474, %v397
      %v476 = vpop.permute.xlu0 %475
      %479 = vset.pattern.permute.xlu0 0
      %480 = vperm.xlu0 %479, %v398
      %v481 = vpop.permute.xlu0 %480
      %484 = vset.pattern.permute.xlu0 0
      %485 = vperm.xlu0 %484, %v399
      %v486 = vpop.permute.xlu0 %485
      %489 = vset.pattern.permute.xlu0 0
      %490 = vperm.xlu0 %489, %v400
      %v491 = vpop.permute.xlu0 %490
      %494 = vset.pattern.permute.xlu0 0
      %495 = vperm.xlu0 %494, %v401
      %v496 = vpop.permute.xlu0 %495
      %499 = vset.pattern.permute.xlu0 0
      %500 = vperm.xlu0 %499, %v402
      %v501 = vpop.permute.xlu0 %500
      %504 = vset.pattern.permute.xlu0 0
      %505 = vperm.xlu0 %504, %v403
      %v506 = vpop.permute.xlu0 %505
      %509 = vset.pattern.permute.xlu0 0
      %510 = vperm.xlu0 %509, %v404
      %v511 = vpop.permute.xlu0 %510
      %514 = vset.pattern.permute.xlu0 0
      %515 = vperm.xlu0 %514, %v405
      %v516 = vpop.permute.xlu0 %515
      %519 = vset.pattern.permute.xlu0 0
      %520 = vperm.xlu0 %519, %v406
      %v521 = vpop.permute.xlu0 %520
      %524 = vset.pattern.permute.xlu0 0
      %525 = vperm.xlu0 %524, %v407
      %v526 = vpop.permute.xlu0 %525
      %529 = vset.pattern.permute.xlu0 0
      %530 = vperm.xlu0 %529, %v408
      %v531 = vpop.permute.xlu0 %530
      %534 = vset.pattern.permute.xlu0 0
      %535 = vperm.xlu0 %534, %v409
      %v536 = vpop.permute.xlu0 %535
      %539 = vset.pattern.permute.xlu0 0
      %540 = vperm.xlu0 %539, %v410
      %v541 = vpop.permute.xlu0 %540
      %544 = vset.pattern.permute.xlu0 0
      %545 = vperm.xlu0 %544, %v411
      %v546 = vpop.permute.xlu0 %545
      %549 = vset.pattern.permute.xlu0 0
      %550 = vperm.xlu0 %549, %v412
      %v551 = vpop.permute.xlu0 %550
      %554 = vset.pattern.permute.xlu0 0
      %555 = vperm.xlu0 %554, %v413
      %v556 = vpop.permute.xlu0 %555
      %559 = vset.pattern.permute.xlu0 0
      %560 = vperm.xlu0 %559, %v414
      %v561 = vpop.permute.xlu0 %560
      %564 = vset.pattern.permute.xlu0 0
      %565 = vperm.xlu0 %564, %v415
      %v566 = vpop.permute.xlu0 %565
      %569 = vset.pattern.permute.xlu0 0
      %570 = vperm.xlu0 %569, %v416
      %v571 = vpop.permute.xlu0 %570
      %574 = vset.pattern.permute.xlu0 0
      %575 = vperm.xlu0 %574, %v417
      %v576 = vpop.permute.xlu0 %575
      %v578 = vmul.f32 %v354, %v421
      %v579 = vmul.f32 %v355, %v426
      %v580 = vmul.f32 %v356, %v431
      %v581 = vmul.f32 %v357, %v436
      %v582 = vmul.f32 %v358, %v441
      %v583 = vmul.f32 %v359, %v446
      %v584 = vmul.f32 %v360, %v451
      %v585 = vmul.f32 %v361, %v456
      %v586 = vmul.f32 %v362, %v461
      %v587 = vmul.f32 %v363, %v466
      %v588 = vmul.f32 %v364, %v471
      %v589 = vmul.f32 %v365, %v476
      %v590 = vmul.f32 %v366, %v481
      %v591 = vmul.f32 %v367, %v486
      %v592 = vmul.f32 %v368, %v491
      %v593 = vmul.f32 %v369, %v496
      %v594 = vmul.f32 %v370, %v501
      %v595 = vmul.f32 %v371, %v506
      %v596 = vmul.f32 %v372, %v511
      %v597 = vmul.f32 %v373, %v516
      %v598 = vmul.f32 %v374, %v521
      %v599 = vmul.f32 %v375, %v526
      %v600 = vmul.f32 %v376, %v531
      %v601 = vmul.f32 %v377, %v536
      %v602 = vmul.f32 %v378, %v541
      %v603 = vmul.f32 %v379, %v546
      %v604 = vmul.f32 %v380, %v551
      %v605 = vmul.f32 %v381, %v556
      %v606 = vmul.f32 %v382, %v561
      %v607 = vmul.f32 %v383, %v566
      %v608 = vmul.f32 %v384, %v571
      %v609 = vmul.f32 %v385, %v576
      %v610 = vld [vmem:[%s348] sm:$0xff]
      %v611 = vld [vmem:[%s348 + $0x8] sm:$0xff]
      %v612 = vld [vmem:[%s348 + $0x10] sm:$0xff]
      %v613 = vld [vmem:[%s348 + $0x18] sm:$0xff]
      %v614 = vld [vmem:[%s3] sm:$0x3]
      %v616 = vperm.slane %v614, 0
      %v617 = vperm.slane %v614, 1
      %v620 = vmul.f32 %v610, %v616
      %v621 = vmul.f32 %v611, %v617
      %v622 = vmul.f32 %v612, %v616
      %v623 = vmul.f32 %v613, %v617
      %v624 = vld [vmem:[%s4] sm:$0xff]
      %v625 = vld [vmem:[%s4 + $0x8] sm:$0xff]
      %v626 = vld [vmem:[%s5] sm:$0x1]
      %v628 = vperm.slane %v626, 0
      %vm630 = vcmask 130048
      %v632 = vsel %vm630, %v578, 0
      %v635 = vsel %vm630, %v579, 0
      %v638 = vsel %vm630, %v580, 0
      %v641 = vsel %vm630, %v581, 0
      %v644 = vsel %vm630, %v582, 0
      %v647 = vsel %vm630, %v583, 0
      %v650 = vsel %vm630, %v584, 0
      %v653 = vsel %vm630, %v585, 0
      %v656 = vsel %vm630, %v586, 0
      %v659 = vsel %vm630, %v587, 0
      %v662 = vsel %vm630, %v588, 0
      %v665 = vsel %vm630, %v589, 0
      %v668 = vsel %vm630, %v590, 0
      %v671 = vsel %vm630, %v591, 0
      %v674 = vsel %vm630, %v592, 0
      %v677 = vsel %vm630, %v593, 0
      %v680 = vsel %vm630, %v594, 0
      %v683 = vsel %vm630, %v595, 0
      %v686 = vsel %vm630, %v596, 0
      %v689 = vsel %vm630, %v597, 0
      %v692 = vsel %vm630, %v598, 0
      %v695 = vsel %vm630, %v599, 0
      %v698 = vsel %vm630, %v600, 0
      %v701 = vsel %vm630, %v601, 0
      %v704 = vsel %vm630, %v602, 0
      %v707 = vsel %vm630, %v603, 0
      %v710 = vsel %vm630, %v604, 0
      %v713 = vsel %vm630, %v605, 0
      %v716 = vsel %vm630, %v606, 0
      %v719 = vsel %vm630, %v607, 0
      %v722 = vsel %vm630, %v608, 0
      %v725 = vsel %vm630, %v609, 0
      %727 = vmatpush.msra.mxu0 0.0
      %728 = vmatpush.msra.mxu0 0.0
      %729 = vmatpush.msra.mxu0 0.0
      %730 = vmatpush.msra.mxu0 0.0
      %731 = vmatpush.msra.mxu0 0.0
      %732 = vmatpush.msra.mxu0 0.0
      %733 = vmatpush.msra.mxu0 0.0
      %734 = vmatpush.msra.mxu0 0.0
      %735 = vmatpush.msra.mxu0 0.0
      %736 = vmatpush.msra.mxu0 0.0
      %737 = vmatpush.msra.mxu0 0.0
      %738 = vmatpush.msra.mxu0 0.0
      %739 = vmatpush.msra.mxu0 0.0
      %740 = vmatpush.msra.mxu0 0.0
      %741 = vmatpush.msra.mxu0 %v625
      %742 = vmatpush.msra.mxu0 %v624
      %743 = vmatmul.f32.gmra.mxu0 %v632
      %v744 = vpop.f32.mrf.mxu0
      %v745 = vadd.f32 %v628, %v744
      %746 = vmatmul.f32.gmra.mxu0 %v635
      %v747 = vpop.f32.mrf.mxu0
      %v748 = vadd.f32 %v628, %v747
      %749 = vmatmul.f32.gmra.mxu0 %v638
      %v750 = vpop.f32.mrf.mxu0
      %v751 = vadd.f32 %v628, %v750
      %752 = vmatmul.f32.gmra.mxu0 %v641
      %v753 = vpop.f32.mrf.mxu0
      %v754 = vadd.f32 %v628, %v753
      %755 = vmatmul.f32.gmra.mxu0 %v644
      %v756 = vpop.f32.mrf.mxu0
      %v757 = vadd.f32 %v628, %v756
      %758 = vmatmul.f32.gmra.mxu0 %v647
      %v759 = vpop.f32.mrf.mxu0
      %v760 = vadd.f32 %v628, %v759
      %761 = vmatmul.f32.gmra.mxu0 %v650
      %v762 = vpop.f32.mrf.mxu0
      %v763 = vadd.f32 %v628, %v762
      %764 = vmatmul.f32.gmra.mxu0 %v653
      %v765 = vpop.f32.mrf.mxu0
      %v766 = vadd.f32 %v628, %v765
      %767 = vmatmul.f32.gmra.mxu0 %v656
      %v768 = vpop.f32.mrf.mxu0
      %v769 = vadd.f32 %v628, %v768
      %770 = vmatmul.f32.gmra.mxu0 %v659
      %v771 = vpop.f32.mrf.mxu0
      %v772 = vadd.f32 %v628, %v771
      %773 = vmatmul.f32.gmra.mxu0 %v662
      %v774 = vpop.f32.mrf.mxu0
      %v775 = vadd.f32 %v628, %v774
      %776 = vmatmul.f32.gmra.mxu0 %v665
      %v777 = vpop.f32.mrf.mxu0
      %v778 = vadd.f32 %v628, %v777
      %779 = vmatmul.f32.gmra.mxu0 %v668
      %v780 = vpop.f32.mrf.mxu0
      %v781 = vadd.f32 %v628, %v780
      %782 = vmatmul.f32.gmra.mxu0 %v671
      %v783 = vpop.f32.mrf.mxu0
      %v784 = vadd.f32 %v628, %v783
      %785 = vmatmul.f32.gmra.mxu0 %v674
      %v786 = vpop.f32.mrf.mxu0
      %v787 = vadd.f32 %v628, %v786
      %788 = vmatmul.f32.gmra.mxu0 %v677
      %v789 = vpop.f32.mrf.mxu0
      %v790 = vadd.f32 %v628, %v789
      %791 = vmatmul.f32.gmra.mxu0 %v680
      %v792 = vpop.f32.mrf.mxu0
      %v793 = vadd.f32 %v628, %v792
      %794 = vmatmul.f32.gmra.mxu0 %v683
      %v795 = vpop.f32.mrf.mxu0
      %v796 = vadd.f32 %v628, %v795
      %797 = vmatmul.f32.gmra.mxu0 %v686
      %v798 = vpop.f32.mrf.mxu0
      %v799 = vadd.f32 %v628, %v798
      %800 = vmatmul.f32.gmra.mxu0 %v689
      %v801 = vpop.f32.mrf.mxu0
      %v802 = vadd.f32 %v628, %v801
      %803 = vmatmul.f32.gmra.mxu0 %v692
      %v804 = vpop.f32.mrf.mxu0
      %v805 = vadd.f32 %v628, %v804
      %806 = vmatmul.f32.gmra.mxu0 %v695
      %v807 = vpop.f32.mrf.mxu0
      %v808 = vadd.f32 %v628, %v807
      %809 = vmatmul.f32.gmra.mxu0 %v698
      %v810 = vpop.f32.mrf.mxu0
      %v811 = vadd.f32 %v628, %v810
      %812 = vmatmul.f32.gmra.mxu0 %v701
      %v813 = vpop.f32.mrf.mxu0
      %v814 = vadd.f32 %v628, %v813
      %815 = vmatmul.f32.gmra.mxu0 %v704
      %v816 = vpop.f32.mrf.mxu0
      %v817 = vadd.f32 %v628, %v816
      %818 = vmatmul.f32.gmra.mxu0 %v707
      %v819 = vpop.f32.mrf.mxu0
      %v820 = vadd.f32 %v628, %v819
      %821 = vmatmul.f32.gmra.mxu0 %v710
      %v822 = vpop.f32.mrf.mxu0
      %v823 = vadd.f32 %v628, %v822
      %824 = vmatmul.f32.gmra.mxu0 %v713
      %v825 = vpop.f32.mrf.mxu0
      %v826 = vadd.f32 %v628, %v825
      %827 = vmatmul.f32.gmra.mxu0 %v716
      %v828 = vpop.f32.mrf.mxu0
      %v829 = vadd.f32 %v628, %v828
      %830 = vmatmul.f32.gmra.mxu0 %v719
      %v831 = vpop.f32.mrf.mxu0
      %v832 = vadd.f32 %v628, %v831
      %833 = vmatmul.f32.gmra.mxu0 %v722
      %v834 = vpop.f32.mrf.mxu0
      %v835 = vadd.f32 %v628, %v834
      %836 = vmatmul.f32.gmra.mxu0 %v725
      %v837 = vpop.f32.mrf.mxu0
      %v838 = vadd.f32 %v628, %v837
      %839 = vdwg.mxu0
      %v841 = vsel %vm630, %v745, 0
      %v844 = vsel %vm630, %v748, 0
      %v847 = vsel %vm630, %v751, 0
      %v850 = vsel %vm630, %v754, 0
      %v853 = vsel %vm630, %v757, 0
      %v856 = vsel %vm630, %v760, 0
      %v859 = vsel %vm630, %v763, 0
      %v862 = vsel %vm630, %v766, 0
      %v865 = vsel %vm630, %v769, 0
      %v868 = vsel %vm630, %v772, 0
      %v871 = vsel %vm630, %v775, 0
      %v874 = vsel %vm630, %v778, 0
      %v877 = vsel %vm630, %v781, 0
      %v880 = vsel %vm630, %v784, 0
      %v883 = vsel %vm630, %v787, 0
      %v886 = vsel %vm630, %v790, 0
      %v889 = vsel %vm630, %v793, 0
      %v892 = vsel %vm630, %v796, 0
      %v895 = vsel %vm630, %v799, 0
      %v898 = vsel %vm630, %v802, 0
      %v901 = vsel %vm630, %v805, 0
      %v904 = vsel %vm630, %v808, 0
      %v907 = vsel %vm630, %v811, 0
      %v910 = vsel %vm630, %v814, 0
      %v913 = vsel %vm630, %v817, 0
      %v916 = vsel %vm630, %v820, 0
      %v919 = vsel %vm630, %v823, 0
      %v922 = vsel %vm630, %v826, 0
      %v925 = vsel %vm630, %v829, 0
      %v928 = vsel %vm630, %v832, 0
      %v931 = vsel %vm630, %v835, 0
      %v934 = vsel %vm630, %v838, 0
      %936 = vmatpush.msra.mxu0 0.0
      %937 = vmatpush.msra.mxu0 0.0
      %938 = vmatpush.msra.mxu0 0.0
      %939 = vmatpush.msra.mxu0 0.0
      %940 = vmatpush.msra.mxu0 0.0
      %941 = vmatpush.msra.mxu0 0.0
      %942 = vmatpush.msra.mxu0 0.0
      %943 = vmatpush.msra.mxu0 0.0
      %944 = vmatpush.msra.mxu0 0.0
      %945 = vmatpush.msra.mxu0 0.0
      %946 = vmatpush.msra.mxu0 0.0
      %947 = vmatpush.msra.mxu0 0.0
      %948 = vmatpush.msra.mxu0 0.0
      %949 = vmatpush.msra.mxu0 0.0
      %950 = vmatpush.msra.mxu0 %v622
      %951 = vmatpush.msra.mxu0 %v620
      %952 = vmatmul.f32.gmra.mxu0 %v841
      %v953 = vpop.f32.mrf.mxu0
      %v954 = vadd.f32 0.0, %v953
      %955 = vmatmul.f32.gmra.mxu0 %v844
      %v956 = vpop.f32.mrf.mxu0
      %v957 = vadd.f32 0.0, %v956
      %958 = vmatmul.f32.gmra.mxu0 %v847
      %v959 = vpop.f32.mrf.mxu0
      %v960 = vadd.f32 0.0, %v959
      %961 = vmatmul.f32.gmra.mxu0 %v850
      %v962 = vpop.f32.mrf.mxu0
      %v963 = vadd.f32 0.0, %v962
      %964 = vmatmul.f32.gmra.mxu0 %v853
      %v965 = vpop.f32.mrf.mxu0
      %v966 = vadd.f32 0.0, %v965
      %967 = vmatmul.f32.gmra.mxu0 %v856
      %v968 = vpop.f32.mrf.mxu0
      %v969 = vadd.f32 0.0, %v968
      %970 = vmatmul.f32.gmra.mxu0 %v859
      %v971 = vpop.f32.mrf.mxu0
      %v972 = vadd.f32 0.0, %v971
      %973 = vmatmul.f32.gmra.mxu0 %v862
      %v974 = vpop.f32.mrf.mxu0
      %v975 = vadd.f32 0.0, %v974
      %976 = vmatmul.f32.gmra.mxu0 %v865
      %v977 = vpop.f32.mrf.mxu0
      %v978 = vadd.f32 0.0, %v977
      %979 = vmatmul.f32.gmra.mxu0 %v868
      %v980 = vpop.f32.mrf.mxu0
      %v981 = vadd.f32 0.0, %v980
      %982 = vmatmul.f32.gmra.mxu0 %v871
      %v983 = vpop.f32.mrf.mxu0
      %v984 = vadd.f32 0.0, %v983
      %985 = vmatmul.f32.gmra.mxu0 %v874
      %v986 = vpop.f32.mrf.mxu0
      %v987 = vadd.f32 0.0, %v986
      %988 = vmatmul.f32.gmra.mxu0 %v877
      %v989 = vpop.f32.mrf.mxu0
      %v990 = vadd.f32 0.0, %v989
      %991 = vmatmul.f32.gmra.mxu0 %v880
      %v992 = vpop.f32.mrf.mxu0
      %v993 = vadd.f32 0.0, %v992
      %994 = vmatmul.f32.gmra.mxu0 %v883
      %v995 = vpop.f32.mrf.mxu0
      %v996 = vadd.f32 0.0, %v995
      %997 = vmatmul.f32.gmra.mxu0 %v886
      %v998 = vpop.f32.mrf.mxu0
      %v999 = vadd.f32 0.0, %v998
      %1000 = vmatmul.f32.gmra.mxu0 %v889
      %v1001 = vpop.f32.mrf.mxu0
      %v1002 = vadd.f32 0.0, %v1001
      %1003 = vmatmul.f32.gmra.mxu0 %v892
      %v1004 = vpop.f32.mrf.mxu0
      %v1005 = vadd.f32 0.0, %v1004
      %1006 = vmatmul.f32.gmra.mxu0 %v895
      %v1007 = vpop.f32.mrf.mxu0
      %v1008 = vadd.f32 0.0, %v1007
      %1009 = vmatmul.f32.gmra.mxu0 %v898
      %v1010 = vpop.f32.mrf.mxu0
      %v1011 = vadd.f32 0.0, %v1010
      %1012 = vmatmul.f32.gmra.mxu0 %v901
      %v1013 = vpop.f32.mrf.mxu0
      %v1014 = vadd.f32 0.0, %v1013
      %1015 = vmatmul.f32.gmra.mxu0 %v904
      %v1016 = vpop.f32.mrf.mxu0
      %v1017 = vadd.f32 0.0, %v1016
      %1018 = vmatmul.f32.gmra.mxu0 %v907
      %v1019 = vpop.f32.mrf.mxu0
      %v1020 = vadd.f32 0.0, %v1019
      %1021 = vmatmul.f32.gmra.mxu0 %v910
      %v1022 = vpop.f32.mrf.mxu0
      %v1023 = vadd.f32 0.0, %v1022
      %1024 = vmatmul.f32.gmra.mxu0 %v913
      %v1025 = vpop.f32.mrf.mxu0
      %v1026 = vadd.f32 0.0, %v1025
      %1027 = vmatmul.f32.gmra.mxu0 %v916
      %v1028 = vpop.f32.mrf.mxu0
      %v1029 = vadd.f32 0.0, %v1028
      %1030 = vmatmul.f32.gmra.mxu0 %v919
      %v1031 = vpop.f32.mrf.mxu0
      %v1032 = vadd.f32 0.0, %v1031
      %1033 = vmatmul.f32.gmra.mxu0 %v922
      %v1034 = vpop.f32.mrf.mxu0
      %v1035 = vadd.f32 0.0, %v1034
      %1036 = vmatmul.f32.gmra.mxu0 %v925
      %v1037 = vpop.f32.mrf.mxu0
      %v1038 = vadd.f32 0.0, %v1037
      %1039 = vmatmul.f32.gmra.mxu0 %v928
      %v1040 = vpop.f32.mrf.mxu0
      %v1041 = vadd.f32 0.0, %v1040
      %1042 = vmatmul.f32.gmra.mxu0 %v931
      %v1043 = vpop.f32.mrf.mxu0
      %v1044 = vadd.f32 0.0, %v1043
      %1045 = vmatmul.f32.gmra.mxu0 %v934
      %v1046 = vpop.f32.mrf.mxu0
      %v1047 = vadd.f32 0.0, %v1046
      %1048 = vdwg.mxu0
      %1049 = vmatpush.msra.mxu0 0.0
      %1050 = vmatpush.msra.mxu0 0.0
      %1051 = vmatpush.msra.mxu0 0.0
      %1052 = vmatpush.msra.mxu0 0.0
      %1053 = vmatpush.msra.mxu0 0.0
      %1054 = vmatpush.msra.mxu0 0.0
      %1055 = vmatpush.msra.mxu0 0.0
      %1056 = vmatpush.msra.mxu0 0.0
      %1057 = vmatpush.msra.mxu0 0.0
      %1058 = vmatpush.msra.mxu0 0.0
      %1059 = vmatpush.msra.mxu0 0.0
      %1060 = vmatpush.msra.mxu0 0.0
      %1061 = vmatpush.msra.mxu0 0.0
      %1062 = vmatpush.msra.mxu0 0.0
      %1063 = vmatpush.msra.mxu0 %v623
      %1064 = vmatpush.msra.mxu0 %v621
      %1065 = vmatmul.f32.gmra.mxu0 %v841
      %v1066 = vpop.f32.mrf.mxu0
      %v1067 = vadd.f32 0.0, %v1066
      %1068 = vmatmul.f32.gmra.mxu0 %v844
      %v1069 = vpop.f32.mrf.mxu0
      %v1070 = vadd.f32 0.0, %v1069
      %1071 = vmatmul.f32.gmra.mxu0 %v847
      %v1072 = vpop.f32.mrf.mxu0
      %v1073 = vadd.f32 0.0, %v1072
      %1074 = vmatmul.f32.gmra.mxu0 %v850
      %v1075 = vpop.f32.mrf.mxu0
      %v1076 = vadd.f32 0.0, %v1075
      %1077 = vmatmul.f32.gmra.mxu0 %v853
      %v1078 = vpop.f32.mrf.mxu0
      %v1079 = vadd.f32 0.0, %v1078
      %1080 = vmatmul.f32.gmra.mxu0 %v856
      %v1081 = vpop.f32.mrf.mxu0
      %v1082 = vadd.f32 0.0, %v1081
      %1083 = vmatmul.f32.gmra.mxu0 %v859
      %v1084 = vpop.f32.mrf.mxu0
      %v1085 = vadd.f32 0.0, %v1084
      %1086 = vmatmul.f32.gmra.mxu0 %v862
      %v1087 = vpop.f32.mrf.mxu0
      %v1088 = vadd.f32 0.0, %v1087
      %1089 = vmatmul.f32.gmra.mxu0 %v865
      %v1090 = vpop.f32.mrf.mxu0
      %v1091 = vadd.f32 0.0, %v1090
      %1092 = vmatmul.f32.gmra.mxu0 %v868
      %v1093 = vpop.f32.mrf.mxu0
      %v1094 = vadd.f32 0.0, %v1093
      %1095 = vmatmul.f32.gmra.mxu0 %v871
      %v1096 = vpop.f32.mrf.mxu0
      %v1097 = vadd.f32 0.0, %v1096
      %1098 = vmatmul.f32.gmra.mxu0 %v874
      %v1099 = vpop.f32.mrf.mxu0
      %v1100 = vadd.f32 0.0, %v1099
      %1101 = vmatmul.f32.gmra.mxu0 %v877
      %v1102 = vpop.f32.mrf.mxu0
      %v1103 = vadd.f32 0.0, %v1102
      %1104 = vmatmul.f32.gmra.mxu0 %v880
      %v1105 = vpop.f32.mrf.mxu0
      %v1106 = vadd.f32 0.0, %v1105
      %1107 = vmatmul.f32.gmra.mxu0 %v883
      %v1108 = vpop.f32.mrf.mxu0
      %v1109 = vadd.f32 0.0, %v1108
      %1110 = vmatmul.f32.gmra.mxu0 %v886
      %v1111 = vpop.f32.mrf.mxu0
      %v1112 = vadd.f32 0.0, %v1111
      %1113 = vmatmul.f32.gmra.mxu0 %v889
      %v1114 = vpop.f32.mrf.mxu0
      %v1115 = vadd.f32 0.0, %v1114
      %1116 = vmatmul.f32.gmra.mxu0 %v892
      %v1117 = vpop.f32.mrf.mxu0
      %v1118 = vadd.f32 0.0, %v1117
      %1119 = vmatmul.f32.gmra.mxu0 %v895
      %v1120 = vpop.f32.mrf.mxu0
      %v1121 = vadd.f32 0.0, %v1120
      %1122 = vmatmul.f32.gmra.mxu0 %v898
      %v1123 = vpop.f32.mrf.mxu0
      %v1124 = vadd.f32 0.0, %v1123
      %1125 = vmatmul.f32.gmra.mxu0 %v901
      %v1126 = vpop.f32.mrf.mxu0
      %v1127 = vadd.f32 0.0, %v1126
      %1128 = vmatmul.f32.gmra.mxu0 %v904
      %v1129 = vpop.f32.mrf.mxu0
      %v1130 = vadd.f32 0.0, %v1129
      %1131 = vmatmul.f32.gmra.mxu0 %v907
      %v1132 = vpop.f32.mrf.mxu0
      %v1133 = vadd.f32 0.0, %v1132
      %1134 = vmatmul.f32.gmra.mxu0 %v910
      %v1135 = vpop.f32.mrf.mxu0
      %v1136 = vadd.f32 0.0, %v1135
      %1137 = vmatmul.f32.gmra.mxu0 %v913
      %v1138 = vpop.f32.mrf.mxu0
      %v1139 = vadd.f32 0.0, %v1138
      %1140 = vmatmul.f32.gmra.mxu0 %v916
      %v1141 = vpop.f32.mrf.mxu0
      %v1142 = vadd.f32 0.0, %v1141
      %1143 = vmatmul.f32.gmra.mxu0 %v919
      %v1144 = vpop.f32.mrf.mxu0
      %v1145 = vadd.f32 0.0, %v1144
      %1146 = vmatmul.f32.gmra.mxu0 %v922
      %v1147 = vpop.f32.mrf.mxu0
      %v1148 = vadd.f32 0.0, %v1147
      %1149 = vmatmul.f32.gmra.mxu0 %v925
      %v1150 = vpop.f32.mrf.mxu0
      %v1151 = vadd.f32 0.0, %v1150
      %1152 = vmatmul.f32.gmra.mxu0 %v928
      %v1153 = vpop.f32.mrf.mxu0
      %v1154 = vadd.f32 0.0, %v1153
      %1155 = vmatmul.f32.gmra.mxu0 %v931
      %v1156 = vpop.f32.mrf.mxu0
      %v1157 = vadd.f32 0.0, %v1156
      %1158 = vmatmul.f32.gmra.mxu0 %v934
      %v1159 = vpop.f32.mrf.mxu0
      %v1160 = vadd.f32 0.0, %v1159
      %1161 = vdwg.mxu0
      %v1162 = vld [vmem:[%s6] sm:$0xff]
      %v1163 = vld [vmem:[%s6 + $0x8] sm:$0xff]
      %v1164 = vld [vmem:[%s7] sm:$0x1]
      %v1166 = vperm.slane %v1164, 0
      %1168 = vmatpush.msra.mxu0 0.0
      %1169 = vmatpush.msra.mxu0 0.0
      %1170 = vmatpush.msra.mxu0 0.0
      %1171 = vmatpush.msra.mxu0 0.0
      %1172 = vmatpush.msra.mxu0 0.0
      %1173 = vmatpush.msra.mxu0 0.0
      %1174 = vmatpush.msra.mxu0 0.0
      %1175 = vmatpush.msra.mxu0 0.0
      %1176 = vmatpush.msra.mxu0 0.0
      %1177 = vmatpush.msra.mxu0 0.0
      %1178 = vmatpush.msra.mxu0 0.0
      %1179 = vmatpush.msra.mxu0 0.0
      %1180 = vmatpush.msra.mxu0 0.0
      %1181 = vmatpush.msra.mxu0 0.0
      %1182 = vmatpush.msra.mxu0 %v1163
      %1183 = vmatpush.msra.mxu0 %v1162
      %1184 = vmatmul.f32.gmra.mxu0 %v632
      %v1185 = vpop.f32.mrf.mxu0
      %v1186 = vadd.f32 %v1166, %v1185
      %1187 = vmatmul.f32.gmra.mxu0 %v635
      %v1188 = vpop.f32.mrf.mxu0
      %v1189 = vadd.f32 %v1166, %v1188
      %1190 = vmatmul.f32.gmra.mxu0 %v638
      %v1191 = vpop.f32.mrf.mxu0
      %v1192 = vadd.f32 %v1166, %v1191
      %1193 = vmatmul.f32.gmra.mxu0 %v641
      %v1194 = vpop.f32.mrf.mxu0
      %v1195 = vadd.f32 %v1166, %v1194
      %1196 = vmatmul.f32.gmra.mxu0 %v644
      %v1197 = vpop.f32.mrf.mxu0
      %v1198 = vadd.f32 %v1166, %v1197
      %1199 = vmatmul.f32.gmra.mxu0 %v647
      %v1200 = vpop.f32.mrf.mxu0
      %v1201 = vadd.f32 %v1166, %v1200
      %1202 = vmatmul.f32.gmra.mxu0 %v650
      %v1203 = vpop.f32.mrf.mxu0
      %v1204 = vadd.f32 %v1166, %v1203
      %1205 = vmatmul.f32.gmra.mxu0 %v653
      %v1206 = vpop.f32.mrf.mxu0
      %v1207 = vadd.f32 %v1166, %v1206
      %1208 = vmatmul.f32.gmra.mxu0 %v656
      %v1209 = vpop.f32.mrf.mxu0
      %v1210 = vadd.f32 %v1166, %v1209
      %1211 = vmatmul.f32.gmra.mxu0 %v659
      %v1212 = vpop.f32.mrf.mxu0
      %v1213 = vadd.f32 %v1166, %v1212
      %1214 = vmatmul.f32.gmra.mxu0 %v662
      %v1215 = vpop.f32.mrf.mxu0
      %v1216 = vadd.f32 %v1166, %v1215
      %1217 = vmatmul.f32.gmra.mxu0 %v665
      %v1218 = vpop.f32.mrf.mxu0
      %v1219 = vadd.f32 %v1166, %v1218
      %1220 = vmatmul.f32.gmra.mxu0 %v668
      %v1221 = vpop.f32.mrf.mxu0
      %v1222 = vadd.f32 %v1166, %v1221
      %1223 = vmatmul.f32.gmra.mxu0 %v671
      %v1224 = vpop.f32.mrf.mxu0
      %v1225 = vadd.f32 %v1166, %v1224
      %1226 = vmatmul.f32.gmra.mxu0 %v674
      %v1227 = vpop.f32.mrf.mxu0
      %v1228 = vadd.f32 %v1166, %v1227
      %1229 = vmatmul.f32.gmra.mxu0 %v677
      %v1230 = vpop.f32.mrf.mxu0
      %v1231 = vadd.f32 %v1166, %v1230
      %1232 = vmatmul.f32.gmra.mxu0 %v680
      %v1233 = vpop.f32.mrf.mxu0
      %v1234 = vadd.f32 %v1166, %v1233
      %1235 = vmatmul.f32.gmra.mxu0 %v683
      %v1236 = vpop.f32.mrf.mxu0
      %v1237 = vadd.f32 %v1166, %v1236
      %1238 = vmatmul.f32.gmra.mxu0 %v686
      %v1239 = vpop.f32.mrf.mxu0
      %v1240 = vadd.f32 %v1166, %v1239
      %1241 = vmatmul.f32.gmra.mxu0 %v689
      %v1242 = vpop.f32.mrf.mxu0
      %v1243 = vadd.f32 %v1166, %v1242
      %1244 = vmatmul.f32.gmra.mxu0 %v692
      %v1245 = vpop.f32.mrf.mxu0
      %v1246 = vadd.f32 %v1166, %v1245
      %1247 = vmatmul.f32.gmra.mxu0 %v695
      %v1248 = vpop.f32.mrf.mxu0
      %v1249 = vadd.f32 %v1166, %v1248
      %1250 = vmatmul.f32.gmra.mxu0 %v698
      %v1251 = vpop.f32.mrf.mxu0
      %v1252 = vadd.f32 %v1166, %v1251
      %1253 = vmatmul.f32.gmra.mxu0 %v701
      %v1254 = vpop.f32.mrf.mxu0
      %v1255 = vadd.f32 %v1166, %v1254
      %1256 = vmatmul.f32.gmra.mxu0 %v704
      %v1257 = vpop.f32.mrf.mxu0
      %v1258 = vadd.f32 %v1166, %v1257
      %1259 = vmatmul.f32.gmra.mxu0 %v707
      %v1260 = vpop.f32.mrf.mxu0
      %v1261 = vadd.f32 %v1166, %v1260
      %1262 = vmatmul.f32.gmra.mxu0 %v710
      %v1263 = vpop.f32.mrf.mxu0
      %v1264 = vadd.f32 %v1166, %v1263
      %1265 = vmatmul.f32.gmra.mxu0 %v713
      %v1266 = vpop.f32.mrf.mxu0
      %v1267 = vadd.f32 %v1166, %v1266
      %1268 = vmatmul.f32.gmra.mxu0 %v716
      %v1269 = vpop.f32.mrf.mxu0
      %v1270 = vadd.f32 %v1166, %v1269
      %1271 = vmatmul.f32.gmra.mxu0 %v719
      %v1272 = vpop.f32.mrf.mxu0
      %v1273 = vadd.f32 %v1166, %v1272
      %1274 = vmatmul.f32.gmra.mxu0 %v722
      %v1275 = vpop.f32.mrf.mxu0
      %v1276 = vadd.f32 %v1166, %v1275
      %1277 = vmatmul.f32.gmra.mxu0 %v725
      %v1278 = vpop.f32.mrf.mxu0
      %v1279 = vadd.f32 %v1166, %v1278
      %1280 = vdwg.mxu0
      %v1281 = vmax.f32 %v954, %v1067
      %1282 = vmax.xlane.f32.xlu0 %v1281
      %v1283 = vpop.xlane.xlu0 %1282
      %v1284 = vmax.f32 %v957, %v1070
      %1285 = vmax.xlane.f32.xlu0 %v1284
      %v1286 = vpop.xlane.xlu0 %1285
      %v1287 = vmax.f32 %v960, %v1073
      %1288 = vmax.xlane.f32.xlu0 %v1287
      %v1289 = vpop.xlane.xlu0 %1288
      %v1290 = vmax.f32 %v963, %v1076
      %1291 = vmax.xlane.f32.xlu0 %v1290
      %v1292 = vpop.xlane.xlu0 %1291
      %v1293 = vmax.f32 %v966, %v1079
      %1294 = vmax.xlane.f32.xlu0 %v1293
      %v1295 = vpop.xlane.xlu0 %1294
      %v1296 = vmax.f32 %v969, %v1082
      %1297 = vmax.xlane.f32.xlu0 %v1296
      %v1298 = vpop.xlane.xlu0 %1297
      %v1299 = vmax.f32 %v972, %v1085
      %1300 = vmax.xlane.f32.xlu0 %v1299
      %v1301 = vpop.xlane.xlu0 %1300
      %v1302 = vmax.f32 %v975, %v1088
      %1303 = vmax.xlane.f32.xlu0 %v1302
      %v1304 = vpop.xlane.xlu0 %1303
      %v1305 = vmax.f32 %v978, %v1091
      %1306 = vmax.xlane.f32.xlu0 %v1305
      %v1307 = vpop.xlane.xlu0 %1306
      %v1308 = vmax.f32 %v981, %v1094
      %1309 = vmax.xlane.f32.xlu0 %v1308
      %v1310 = vpop.xlane.xlu0 %1309
      %v1311 = vmax.f32 %v984, %v1097
      %1312 = vmax.xlane.f32.xlu0 %v1311
      %v1313 = vpop.xlane.xlu0 %1312
      %v1314 = vmax.f32 %v987, %v1100
      %1315 = vmax.xlane.f32.xlu0 %v1314
      %v1316 = vpop.xlane.xlu0 %1315
      %v1317 = vmax.f32 %v990, %v1103
      %1318 = vmax.xlane.f32.xlu0 %v1317
      %v1319 = vpop.xlane.xlu0 %1318
      %v1320 = vmax.f32 %v993, %v1106
      %1321 = vmax.xlane.f32.xlu0 %v1320
      %v1322 = vpop.xlane.xlu0 %1321
      %v1323 = vmax.f32 %v996, %v1109
      %1324 = vmax.xlane.f32.xlu0 %v1323
      %v1325 = vpop.xlane.xlu0 %1324
      %v1326 = vmax.f32 %v999, %v1112
      %1327 = vmax.xlane.f32.xlu0 %v1326
      %v1328 = vpop.xlane.xlu0 %1327
      %v1329 = vmax.f32 %v1002, %v1115
      %1330 = vmax.xlane.f32.xlu0 %v1329
      %v1331 = vpop.xlane.xlu0 %1330
      %v1332 = vmax.f32 %v1005, %v1118
      %1333 = vmax.xlane.f32.xlu0 %v1332
      %v1334 = vpop.xlane.xlu0 %1333
      %v1335 = vmax.f32 %v1008, %v1121
      %1336 = vmax.xlane.f32.xlu0 %v1335
      %v1337 = vpop.xlane.xlu0 %1336
      %v1338 = vmax.f32 %v1011, %v1124
      %1339 = vmax.xlane.f32.xlu0 %v1338
      %v1340 = vpop.xlane.xlu0 %1339
      %v1341 = vmax.f32 %v1014, %v1127
      %1342 = vmax.xlane.f32.xlu0 %v1341
      %v1343 = vpop.xlane.xlu0 %1342
      %v1344 = vmax.f32 %v1017, %v1130
      %1345 = vmax.xlane.f32.xlu0 %v1344
      %v1346 = vpop.xlane.xlu0 %1345
      %v1347 = vmax.f32 %v1020, %v1133
      %1348 = vmax.xlane.f32.xlu0 %v1347
      %v1349 = vpop.xlane.xlu0 %1348
      %v1350 = vmax.f32 %v1023, %v1136
      %1351 = vmax.xlane.f32.xlu0 %v1350
      %v1352 = vpop.xlane.xlu0 %1351
      %v1353 = vmax.f32 %v1026, %v1139
      %1354 = vmax.xlane.f32.xlu0 %v1353
      %v1355 = vpop.xlane.xlu0 %1354
      %v1356 = vmax.f32 %v1029, %v1142
      %1357 = vmax.xlane.f32.xlu0 %v1356
      %v1358 = vpop.xlane.xlu0 %1357
      %v1359 = vmax.f32 %v1032, %v1145
      %1360 = vmax.xlane.f32.xlu0 %v1359
      %v1361 = vpop.xlane.xlu0 %1360
      %v1362 = vmax.f32 %v1035, %v1148
      %1363 = vmax.xlane.f32.xlu0 %v1362
      %v1364 = vpop.xlane.xlu0 %1363
      %v1365 = vmax.f32 %v1038, %v1151
      %1366 = vmax.xlane.f32.xlu0 %v1365
      %v1367 = vpop.xlane.xlu0 %1366
      %v1368 = vmax.f32 %v1041, %v1154
      %1369 = vmax.xlane.f32.xlu0 %v1368
      %v1370 = vpop.xlane.xlu0 %1369
      %v1371 = vmax.f32 %v1044, %v1157
      %1372 = vmax.xlane.f32.xlu0 %v1371
      %v1373 = vpop.xlane.xlu0 %1372
      %v1374 = vmax.f32 %v1047, %v1160
      %1375 = vmax.xlane.f32.xlu0 %v1374
      %v1376 = vpop.xlane.xlu0 %1375
      %v1377 = vsub.f32 %v954, %v1283
      %v1378 = vsub.f32 %v1067, %v1283
      %v1379 = vsub.f32 %v957, %v1286
      %v1380 = vsub.f32 %v1070, %v1286
      %v1381 = vsub.f32 %v960, %v1289
      %v1382 = vsub.f32 %v1073, %v1289
      %v1383 = vsub.f32 %v963, %v1292
      %v1384 = vsub.f32 %v1076, %v1292
      %v1385 = vsub.f32 %v966, %v1295
      %v1386 = vsub.f32 %v1079, %v1295
      %v1387 = vsub.f32 %v969, %v1298
      %v1388 = vsub.f32 %v1082, %v1298
      %v1389 = vsub.f32 %v972, %v1301
      %v1390 = vsub.f32 %v1085, %v1301
      %v1391 = vsub.f32 %v975, %v1304
      %v1392 = vsub.f32 %v1088, %v1304
      %v1393 = vsub.f32 %v978, %v1307
      %v1394 = vsub.f32 %v1091, %v1307
      %v1395 = vsub.f32 %v981, %v1310
      %v1396 = vsub.f32 %v1094, %v1310
      %v1397 = vsub.f32 %v984, %v1313
      %v1398 = vsub.f32 %v1097, %v1313
      %v1399 = vsub.f32 %v987, %v1316
      %v1400 = vsub.f32 %v1100, %v1316
      %v1401 = vsub.f32 %v990, %v1319
      %v1402 = vsub.f32 %v1103, %v1319
      %v1403 = vsub.f32 %v993, %v1322
      %v1404 = vsub.f32 %v1106, %v1322
      %v1405 = vsub.f32 %v996, %v1325
      %v1406 = vsub.f32 %v1109, %v1325
      %v1407 = vsub.f32 %v999, %v1328
      %v1408 = vsub.f32 %v1112, %v1328
      %v1409 = vsub.f32 %v1002, %v1331
      %v1410 = vsub.f32 %v1115, %v1331
      %v1411 = vsub.f32 %v1005, %v1334
      %v1412 = vsub.f32 %v1118, %v1334
      %v1413 = vsub.f32 %v1008, %v1337
      %v1414 = vsub.f32 %v1121, %v1337
      %v1415 = vsub.f32 %v1011, %v1340
      %v1416 = vsub.f32 %v1124, %v1340
      %v1417 = vsub.f32 %v1014, %v1343
      %v1418 = vsub.f32 %v1127, %v1343
      %v1419 = vsub.f32 %v1017, %v1346
      %v1420 = vsub.f32 %v1130, %v1346
      %v1421 = vsub.f32 %v1020, %v1349
      %v1422 = vsub.f32 %v1133, %v1349
      %v1423 = vsub.f32 %v1023, %v1352
      %v1424 = vsub.f32 %v1136, %v1352
      %v1425 = vsub.f32 %v1026, %v1355
      %v1426 = vsub.f32 %v1139, %v1355
      %v1427 = vsub.f32 %v1029, %v1358
      %v1428 = vsub.f32 %v1142, %v1358
      %v1429 = vsub.f32 %v1032, %v1361
      %v1430 = vsub.f32 %v1145, %v1361
      %v1431 = vsub.f32 %v1035, %v1364
      %v1432 = vsub.f32 %v1148, %v1364
      %v1433 = vsub.f32 %v1038, %v1367
      %v1434 = vsub.f32 %v1151, %v1367
      %v1435 = vsub.f32 %v1041, %v1370
      %v1436 = vsub.f32 %v1154, %v1370
      %v1437 = vsub.f32 %v1044, %v1373
      %v1438 = vsub.f32 %v1157, %v1373
      %v1439 = vsub.f32 %v1047, %v1376
      %v1440 = vsub.f32 %v1160, %v1376
      %v1441 = vmul.f32 %v1377, 1.442695
      %v1442 = vpow.pop %v1441
      %v1443 = vmul.f32 %v1378, 1.442695
      %v1444 = vpow.pop %v1443
      %v1445 = vmul.f32 %v1379, 1.442695
      %v1446 = vpow.pop %v1445
      %v1447 = vmul.f32 %v1380, 1.442695
      %v1448 = vpow.pop %v1447
      %v1449 = vmul.f32 %v1381, 1.442695
      %v1450 = vpow.pop %v1449
      %v1451 = vmul.f32 %v1382, 1.442695
      %v1452 = vpow.pop %v1451
      %v1453 = vmul.f32 %v1383, 1.442695
      %v1454 = vpow.pop %v1453
      %v1455 = vmul.f32 %v1384, 1.442695
      %v1456 = vpow.pop %v1455
      %v1457 = vmul.f32 %v1385, 1.442695
      %v1458 = vpow.pop %v1457
      %v1459 = vmul.f32 %v1386, 1.442695
      %v1460 = vpow.pop %v1459
      %v1461 = vmul.f32 %v1387, 1.442695
      %v1462 = vpow.pop %v1461
      %v1463 = vmul.f32 %v1388, 1.442695
      %v1464 = vpow.pop %v1463
      %v1465 = vmul.f32 %v1389, 1.442695
      %v1466 = vpow.pop %v1465
      %v1467 = vmul.f32 %v1390, 1.442695
      %v1468 = vpow.pop %v1467
      %v1469 = vmul.f32 %v1391, 1.442695
      %v1470 = vpow.pop %v1469
      %v1471 = vmul.f32 %v1392, 1.442695
      %v1472 = vpow.pop %v1471
      %v1473 = vmul.f32 %v1393, 1.442695
      %v1474 = vpow.pop %v1473
      %v1475 = vmul.f32 %v1394, 1.442695
      %v1476 = vpow.pop %v1475
      %v1477 = vmul.f32 %v1395, 1.442695
      %v1478 = vpow.pop %v1477
      %v1479 = vmul.f32 %v1396, 1.442695
      %v1480 = vpow.pop %v1479
      %v1481 = vmul.f32 %v1397, 1.442695
      %v1482 = vpow.pop %v1481
      %v1483 = vmul.f32 %v1398, 1.442695
      %v1484 = vpow.pop %v1483
      %v1485 = vmul.f32 %v1399, 1.442695
      %v1486 = vpow.pop %v1485
      %v1487 = vmul.f32 %v1400, 1.442695
      %v1488 = vpow.pop %v1487
      %v1489 = vmul.f32 %v1401, 1.442695
      %v1490 = vpow.pop %v1489
      %v1491 = vmul.f32 %v1402, 1.442695
      %v1492 = vpow.pop %v1491
      %v1493 = vmul.f32 %v1403, 1.442695
      %v1494 = vpow.pop %v1493
      %v1495 = vmul.f32 %v1404, 1.442695
      %v1496 = vpow.pop %v1495
      %v1497 = vmul.f32 %v1405, 1.442695
      %v1498 = vpow.pop %v1497
      %v1499 = vmul.f32 %v1406, 1.442695
      %v1500 = vpow.pop %v1499
      %v1501 = vmul.f32 %v1407, 1.442695
      %v1502 = vpow.pop %v1501
      %v1503 = vmul.f32 %v1408, 1.442695
      %v1504 = vpow.pop %v1503
      %v1505 = vmul.f32 %v1409, 1.442695
      %v1506 = vpow.pop %v1505
      %v1507 = vmul.f32 %v1410, 1.442695
      %v1508 = vpow.pop %v1507
      %v1509 = vmul.f32 %v1411, 1.442695
      %v1510 = vpow.pop %v1509
      %v1511 = vmul.f32 %v1412, 1.442695
      %v1512 = vpow.pop %v1511
      %v1513 = vmul.f32 %v1413, 1.442695
      %v1514 = vpow.pop %v1513
      %v1515 = vmul.f32 %v1414, 1.442695
      %v1516 = vpow.pop %v1515
      %v1517 = vmul.f32 %v1415, 1.442695
      %v1518 = vpow.pop %v1517
      %v1519 = vmul.f32 %v1416, 1.442695
      %v1520 = vpow.pop %v1519
      %v1521 = vmul.f32 %v1417, 1.442695
      %v1522 = vpow.pop %v1521
      %v1523 = vmul.f32 %v1418, 1.442695
      %v1524 = vpow.pop %v1523
      %v1525 = vmul.f32 %v1419, 1.442695
      %v1526 = vpow.pop %v1525
      %v1527 = vmul.f32 %v1420, 1.442695
      %v1528 = vpow.pop %v1527
      %v1529 = vmul.f32 %v1421, 1.442695
      %v1530 = vpow.pop %v1529
      %v1531 = vmul.f32 %v1422, 1.442695
      %v1532 = vpow.pop %v1531
      %v1533 = vmul.f32 %v1423, 1.442695
      %v1534 = vpow.pop %v1533
      %v1535 = vmul.f32 %v1424, 1.442695
      %v1536 = vpow.pop %v1535
      %v1537 = vmul.f32 %v1425, 1.442695
      %v1538 = vpow.pop %v1537
      %v1539 = vmul.f32 %v1426, 1.442695
      %v1540 = vpow.pop %v1539
      %v1541 = vmul.f32 %v1427, 1.442695
      %v1542 = vpow.pop %v1541
      %v1543 = vmul.f32 %v1428, 1.442695
      %v1544 = vpow.pop %v1543
      %v1545 = vmul.f32 %v1429, 1.442695
      %v1546 = vpow.pop %v1545
      %v1547 = vmul.f32 %v1430, 1.442695
      %v1548 = vpow.pop %v1547
      %v1549 = vmul.f32 %v1431, 1.442695
      %v1550 = vpow.pop %v1549
      %v1551 = vmul.f32 %v1432, 1.442695
      %v1552 = vpow.pop %v1551
      %v1553 = vmul.f32 %v1433, 1.442695
      %v1554 = vpow.pop %v1553
      %v1555 = vmul.f32 %v1434, 1.442695
      %v1556 = vpow.pop %v1555
      %v1557 = vmul.f32 %v1435, 1.442695
      %v1558 = vpow.pop %v1557
      %v1559 = vmul.f32 %v1436, 1.442695
      %v1560 = vpow.pop %v1559
      %v1561 = vmul.f32 %v1437, 1.442695
      %v1562 = vpow.pop %v1561
      %v1563 = vmul.f32 %v1438, 1.442695
      %v1564 = vpow.pop %v1563
      %v1565 = vmul.f32 %v1439, 1.442695
      %v1566 = vpow.pop %v1565
      %v1567 = vmul.f32 %v1440, 1.442695
      %v1568 = vpow.pop %v1567
      %v1569 = vadd.f32 %v1442, %v1444
      %1570 = vadd.xlane.f32.xlu0 %v1569
      %v1571 = vpop.xlane.xlu0 %1570
      %v1572 = vadd.f32 %v1446, %v1448
      %1573 = vadd.xlane.f32.xlu0 %v1572
      %v1574 = vpop.xlane.xlu0 %1573
      %v1575 = vadd.f32 %v1450, %v1452
      %1576 = vadd.xlane.f32.xlu0 %v1575
      %v1577 = vpop.xlane.xlu0 %1576
      %v1578 = vadd.f32 %v1454, %v1456
      %1579 = vadd.xlane.f32.xlu0 %v1578
      %v1580 = vpop.xlane.xlu0 %1579
      %v1581 = vadd.f32 %v1458, %v1460
      %1582 = vadd.xlane.f32.xlu0 %v1581
      %v1583 = vpop.xlane.xlu0 %1582
      %v1584 = vadd.f32 %v1462, %v1464
      %1585 = vadd.xlane.f32.xlu0 %v1584
      %v1586 = vpop.xlane.xlu0 %1585
      %v1587 = vadd.f32 %v1466, %v1468
      %1588 = vadd.xlane.f32.xlu0 %v1587
      %v1589 = vpop.xlane.xlu0 %1588
      %v1590 = vadd.f32 %v1470, %v1472
      %1591 = vadd.xlane.f32.xlu0 %v1590
      %v1592 = vpop.xlane.xlu0 %1591
      %v1593 = vadd.f32 %v1474, %v1476
      %1594 = vadd.xlane.f32.xlu0 %v1593
      %v1595 = vpop.xlane.xlu0 %1594
      %v1596 = vadd.f32 %v1478, %v1480
      %1597 = vadd.xlane.f32.xlu0 %v1596
      %v1598 = vpop.xlane.xlu0 %1597
      %v1599 = vadd.f32 %v1482, %v1484
      %1600 = vadd.xlane.f32.xlu0 %v1599
      %v1601 = vpop.xlane.xlu0 %1600
      %v1602 = vadd.f32 %v1486, %v1488
      %1603 = vadd.xlane.f32.xlu0 %v1602
      %v1604 = vpop.xlane.xlu0 %1603
      %v1605 = vadd.f32 %v1490, %v1492
      %1606 = vadd.xlane.f32.xlu0 %v1605
      %v1607 = vpop.xlane.xlu0 %1606
      %v1608 = vadd.f32 %v1494, %v1496
      %1609 = vadd.xlane.f32.xlu0 %v1608
      %v1610 = vpop.xlane.xlu0 %1609
      %v1611 = vadd.f32 %v1498, %v1500
      %1612 = vadd.xlane.f32.xlu0 %v1611
      %v1613 = vpop.xlane.xlu0 %1612
      %v1614 = vadd.f32 %v1502, %v1504
      %1615 = vadd.xlane.f32.xlu0 %v1614
      %v1616 = vpop.xlane.xlu0 %1615
      %v1617 = vadd.f32 %v1506, %v1508
      %1618 = vadd.xlane.f32.xlu0 %v1617
      %v1619 = vpop.xlane.xlu0 %1618
      %v1620 = vadd.f32 %v1510, %v1512
      %1621 = vadd.xlane.f32.xlu0 %v1620
      %v1622 = vpop.xlane.xlu0 %1621
      %v1623 = vadd.f32 %v1514, %v1516
      %1624 = vadd.xlane.f32.xlu0 %v1623
      %v1625 = vpop.xlane.xlu0 %1624
      %v1626 = vadd.f32 %v1518, %v1520
      %1627 = vadd.xlane.f32.xlu0 %v1626
      %v1628 = vpop.xlane.xlu0 %1627
      %v1629 = vadd.f32 %v1522, %v1524
      %1630 = vadd.xlane.f32.xlu0 %v1629
      %v1631 = vpop.xlane.xlu0 %1630
      %v1632 = vadd.f32 %v1526, %v1528
      %1633 = vadd.xlane.f32.xlu0 %v1632
      %v1634 = vpop.xlane.xlu0 %1633
      %v1635 = vadd.f32 %v1530, %v1532
      %1636 = vadd.xlane.f32.xlu0 %v1635
      %v1637 = vpop.xlane.xlu0 %1636
      %v1638 = vadd.f32 %v1534, %v1536
      %1639 = vadd.xlane.f32.xlu0 %v1638
      %v1640 = vpop.xlane.xlu0 %1639
      %v1641 = vadd.f32 %v1538, %v1540
      %1642 = vadd.xlane.f32.xlu0 %v1641
      %v1643 = vpop.xlane.xlu0 %1642
      %v1644 = vadd.f32 %v1542, %v1544
      %1645 = vadd.xlane.f32.xlu0 %v1644
      %v1646 = vpop.xlane.xlu0 %1645
      %v1647 = vadd.f32 %v1546, %v1548
      %1648 = vadd.xlane.f32.xlu0 %v1647
      %v1649 = vpop.xlane.xlu0 %1648
      %v1650 = vadd.f32 %v1550, %v1552
      %1651 = vadd.xlane.f32.xlu0 %v1650
      %v1652 = vpop.xlane.xlu0 %1651
      %v1653 = vadd.f32 %v1554, %v1556
      %1654 = vadd.xlane.f32.xlu0 %v1653
      %v1655 = vpop.xlane.xlu0 %1654
      %v1656 = vadd.f32 %v1558, %v1560
      %1657 = vadd.xlane.f32.xlu0 %v1656
      %v1658 = vpop.xlane.xlu0 %1657
      %v1659 = vadd.f32 %v1562, %v1564
      %1660 = vadd.xlane.f32.xlu0 %v1659
      %v1661 = vpop.xlane.xlu0 %1660
      %v1662 = vadd.f32 %v1566, %v1568
      %1663 = vadd.xlane.f32.xlu0 %v1662
      %v1664 = vpop.xlane.xlu0 %1663
      %v1665 = vrcp.pop %v1571
      %v1666 = vrcp.pop %v1574
      %v1667 = vrcp.pop %v1577
      %v1668 = vrcp.pop %v1580
      %v1669 = vrcp.pop %v1583
      %v1670 = vrcp.pop %v1586
      %v1671 = vrcp.pop %v1589
      %v1672 = vrcp.pop %v1592
      %v1673 = vrcp.pop %v1595
      %v1674 = vrcp.pop %v1598
      %v1675 = vrcp.pop %v1601
      %v1676 = vrcp.pop %v1604
      %v1677 = vrcp.pop %v1607
      %v1678 = vrcp.pop %v1610
      %v1679 = vrcp.pop %v1613
      %v1680 = vrcp.pop %v1616
      %v1681 = vrcp.pop %v1619
      %v1682 = vrcp.pop %v1622
      %v1683 = vrcp.pop %v1625
      %v1684 = vrcp.pop %v1628
      %v1685 = vrcp.pop %v1631
      %v1686 = vrcp.pop %v1634
      %v1687 = vrcp.pop %v1637
      %v1688 = vrcp.pop %v1640
      %v1689 = vrcp.pop %v1643
      %v1690 = vrcp.pop %v1646
      %v1691 = vrcp.pop %v1649
      %v1692 = vrcp.pop %v1652
      %v1693 = vrcp.pop %v1655
      %v1694 = vrcp.pop %v1658
      %v1695 = vrcp.pop %v1661
      %v1696 = vrcp.pop %v1664
      %v1697 = vmul.f32 %v1442, %v1665
      %v1698 = vmul.f32 %v1444, %v1665
      %v1699 = vmul.f32 %v1446, %v1666
      %v1700 = vmul.f32 %v1448, %v1666
      %v1701 = vmul.f32 %v1450, %v1667
      %v1702 = vmul.f32 %v1452, %v1667
      %v1703 = vmul.f32 %v1454, %v1668
      %v1704 = vmul.f32 %v1456, %v1668
      %v1705 = vmul.f32 %v1458, %v1669
      %v1706 = vmul.f32 %v1460, %v1669
      %v1707 = vmul.f32 %v1462, %v1670
      %v1708 = vmul.f32 %v1464, %v1670
      %v1709 = vmul.f32 %v1466, %v1671
      %v1710 = vmul.f32 %v1468, %v1671
      %v1711 = vmul.f32 %v1470, %v1672
      %v1712 = vmul.f32 %v1472, %v1672
      %v1713 = vmul.f32 %v1474, %v1673
      %v1714 = vmul.f32 %v1476, %v1673
      %v1715 = vmul.f32 %v1478, %v1674
      %v1716 = vmul.f32 %v1480, %v1674
      %v1717 = vmul.f32 %v1482, %v1675
      %v1718 = vmul.f32 %v1484, %v1675
      %v1719 = vmul.f32 %v1486, %v1676
      %v1720 = vmul.f32 %v1488, %v1676
      %v1721 = vmul.f32 %v1490, %v1677
      %v1722 = vmul.f32 %v1492, %v1677
      %v1723 = vmul.f32 %v1494, %v1678
      %v1724 = vmul.f32 %v1496, %v1678
      %v1725 = vmul.f32 %v1498, %v1679
      %v1726 = vmul.f32 %v1500, %v1679
      %v1727 = vmul.f32 %v1502, %v1680
      %v1728 = vmul.f32 %v1504, %v1680
      %v1729 = vmul.f32 %v1506, %v1681
      %v1730 = vmul.f32 %v1508, %v1681
      %v1731 = vmul.f32 %v1510, %v1682
      %v1732 = vmul.f32 %v1512, %v1682
      %v1733 = vmul.f32 %v1514, %v1683
      %v1734 = vmul.f32 %v1516, %v1683
      %v1735 = vmul.f32 %v1518, %v1684
      %v1736 = vmul.f32 %v1520, %v1684
      %v1737 = vmul.f32 %v1522, %v1685
      %v1738 = vmul.f32 %v1524, %v1685
      %v1739 = vmul.f32 %v1526, %v1686
      %v1740 = vmul.f32 %v1528, %v1686
      %v1741 = vmul.f32 %v1530, %v1687
      %v1742 = vmul.f32 %v1532, %v1687
      %v1743 = vmul.f32 %v1534, %v1688
      %v1744 = vmul.f32 %v1536, %v1688
      %v1745 = vmul.f32 %v1538, %v1689
      %v1746 = vmul.f32 %v1540, %v1689
      %v1747 = vmul.f32 %v1542, %v1690
      %v1748 = vmul.f32 %v1544, %v1690
      %v1749 = vmul.f32 %v1546, %v1691
      %v1750 = vmul.f32 %v1548, %v1691
      %v1751 = vmul.f32 %v1550, %v1692
      %v1752 = vmul.f32 %v1552, %v1692
      %v1753 = vmul.f32 %v1554, %v1693
      %v1754 = vmul.f32 %v1556, %v1693
      %v1755 = vmul.f32 %v1558, %v1694
      %v1756 = vmul.f32 %v1560, %v1694
      %v1757 = vmul.f32 %v1562, %v1695
      %v1758 = vmul.f32 %v1564, %v1695
      %v1759 = vmul.f32 %v1566, %v1696
      %v1760 = vmul.f32 %v1568, %v1696
      %1761 = vmatpush.msra.mxu0 %v1231
      %1762 = vmatpush.msra.mxu0 %v1228
      %1763 = vmatpush.msra.mxu0 %v1225
      %1764 = vmatpush.msra.mxu0 %v1222
      %1765 = vmatpush.msra.mxu0 %v1219
      %1766 = vmatpush.msra.mxu0 %v1216
      %1767 = vmatpush.msra.mxu0 %v1213
      %1768 = vmatpush.msra.mxu0 %v1210
      %1769 = vmatpush.msra.mxu0 %v1207
      %1770 = vmatpush.msra.mxu0 %v1204
      %1771 = vmatpush.msra.mxu0 %v1201
      %1772 = vmatpush.msra.mxu0 %v1198
      %1773 = vmatpush.msra.mxu0 %v1195
      %1774 = vmatpush.msra.mxu0 %v1192
      %1775 = vmatpush.msra.mxu0 %v1189
      %1776 = vmatpush.msra.mxu0 %v1186
      %1777 = vmatmul.f32.gmra.mxu0 %v1697
      %v1778 = vpop.f32.mrf.mxu0
      %v1779 = vadd.f32 0.0, %v1778
      %1780 = vmatmul.f32.gmra.mxu0 %v1699
      %v1781 = vpop.f32.mrf.mxu0
      %v1782 = vadd.f32 0.0, %v1781
      %1783 = vmatmul.f32.gmra.mxu0 %v1701
      %v1784 = vpop.f32.mrf.mxu0
      %v1785 = vadd.f32 0.0, %v1784
      %1786 = vmatmul.f32.gmra.mxu0 %v1703
      %v1787 = vpop.f32.mrf.mxu0
      %v1788 = vadd.f32 0.0, %v1787
      %1789 = vmatmul.f32.gmra.mxu0 %v1705
      %v1790 = vpop.f32.mrf.mxu0
      %v1791 = vadd.f32 0.0, %v1790
      %1792 = vmatmul.f32.gmra.mxu0 %v1707
      %v1793 = vpop.f32.mrf.mxu0
      %v1794 = vadd.f32 0.0, %v1793
      %1795 = vmatmul.f32.gmra.mxu0 %v1709
      %v1796 = vpop.f32.mrf.mxu0
      %v1797 = vadd.f32 0.0, %v1796
      %1798 = vmatmul.f32.gmra.mxu0 %v1711
      %v1799 = vpop.f32.mrf.mxu0
      %v1800 = vadd.f32 0.0, %v1799
      %1801 = vmatmul.f32.gmra.mxu0 %v1713
      %v1802 = vpop.f32.mrf.mxu0
      %v1803 = vadd.f32 0.0, %v1802
      %1804 = vmatmul.f32.gmra.mxu0 %v1715
      %v1805 = vpop.f32.mrf.mxu0
      %v1806 = vadd.f32 0.0, %v1805
      %1807 = vmatmul.f32.gmra.mxu0 %v1717
      %v1808 = vpop.f32.mrf.mxu0
      %v1809 = vadd.f32 0.0, %v1808
      %1810 = vmatmul.f32.gmra.mxu0 %v1719
      %v1811 = vpop.f32.mrf.mxu0
      %v1812 = vadd.f32 0.0, %v1811
      %1813 = vmatmul.f32.gmra.mxu0 %v1721
      %v1814 = vpop.f32.mrf.mxu0
      %v1815 = vadd.f32 0.0, %v1814
      %1816 = vmatmul.f32.gmra.mxu0 %v1723
      %v1817 = vpop.f32.mrf.mxu0
      %v1818 = vadd.f32 0.0, %v1817
      %1819 = vmatmul.f32.gmra.mxu0 %v1725
      %v1820 = vpop.f32.mrf.mxu0
      %v1821 = vadd.f32 0.0, %v1820
      %1822 = vmatmul.f32.gmra.mxu0 %v1727
      %v1823 = vpop.f32.mrf.mxu0
      %v1824 = vadd.f32 0.0, %v1823
      %1825 = vmatmul.f32.gmra.mxu0 %v1729
      %v1826 = vpop.f32.mrf.mxu0
      %v1827 = vadd.f32 0.0, %v1826
      %1828 = vmatmul.f32.gmra.mxu0 %v1731
      %v1829 = vpop.f32.mrf.mxu0
      %v1830 = vadd.f32 0.0, %v1829
      %1831 = vmatmul.f32.gmra.mxu0 %v1733
      %v1832 = vpop.f32.mrf.mxu0
      %v1833 = vadd.f32 0.0, %v1832
      %1834 = vmatmul.f32.gmra.mxu0 %v1735
      %v1835 = vpop.f32.mrf.mxu0
      %v1836 = vadd.f32 0.0, %v1835
      %1837 = vmatmul.f32.gmra.mxu0 %v1737
      %v1838 = vpop.f32.mrf.mxu0
      %v1839 = vadd.f32 0.0, %v1838
      %1840 = vmatmul.f32.gmra.mxu0 %v1739
      %v1841 = vpop.f32.mrf.mxu0
      %v1842 = vadd.f32 0.0, %v1841
      %1843 = vmatmul.f32.gmra.mxu0 %v1741
      %v1844 = vpop.f32.mrf.mxu0
      %v1845 = vadd.f32 0.0, %v1844
      %1846 = vmatmul.f32.gmra.mxu0 %v1743
      %v1847 = vpop.f32.mrf.mxu0
      %v1848 = vadd.f32 0.0, %v1847
      %1849 = vmatmul.f32.gmra.mxu0 %v1745
      %v1850 = vpop.f32.mrf.mxu0
      %v1851 = vadd.f32 0.0, %v1850
      %1852 = vmatmul.f32.gmra.mxu0 %v1747
      %v1853 = vpop.f32.mrf.mxu0
      %v1854 = vadd.f32 0.0, %v1853
      %1855 = vmatmul.f32.gmra.mxu0 %v1749
      %v1856 = vpop.f32.mrf.mxu0
      %v1857 = vadd.f32 0.0, %v1856
      %1858 = vmatmul.f32.gmra.mxu0 %v1751
      %v1859 = vpop.f32.mrf.mxu0
      %v1860 = vadd.f32 0.0, %v1859
      %1861 = vmatmul.f32.gmra.mxu0 %v1753
      %v1862 = vpop.f32.mrf.mxu0
      %v1863 = vadd.f32 0.0, %v1862
      %1864 = vmatmul.f32.gmra.mxu0 %v1755
      %v1865 = vpop.f32.mrf.mxu0
      %v1866 = vadd.f32 0.0, %v1865
      %1867 = vmatmul.f32.gmra.mxu0 %v1757
      %v1868 = vpop.f32.mrf.mxu0
      %v1869 = vadd.f32 0.0, %v1868
      %1870 = vmatmul.f32.gmra.mxu0 %v1759
      %v1871 = vpop.f32.mrf.mxu0
      %v1872 = vadd.f32 0.0, %v1871
      %1873 = vdwg.mxu0
      %1874 = vmatpush.msra.mxu0 %v1279
      %1875 = vmatpush.msra.mxu0 %v1276
      %1876 = vmatpush.msra.mxu0 %v1273
      %1877 = vmatpush.msra.mxu0 %v1270
      %1878 = vmatpush.msra.mxu0 %v1267
      %1879 = vmatpush.msra.mxu0 %v1264
      %1880 = vmatpush.msra.mxu0 %v1261
      %1881 = vmatpush.msra.mxu0 %v1258
      %1882 = vmatpush.msra.mxu0 %v1255
      %1883 = vmatpush.msra.mxu0 %v1252
      %1884 = vmatpush.msra.mxu0 %v1249
      %1885 = vmatpush.msra.mxu0 %v1246
      %1886 = vmatpush.msra.mxu0 %v1243
      %1887 = vmatpush.msra.mxu0 %v1240
      %1888 = vmatpush.msra.mxu0 %v1237
      %1889 = vmatpush.msra.mxu0 %v1234
      %1890 = vmatmul.f32.gmra.mxu0 %v1698
      %v1891 = vpop.f32.mrf.mxu0
      %v1892 = vadd.f32 %v1779, %v1891
      %1893 = vmatmul.f32.gmra.mxu0 %v1700
      %v1894 = vpop.f32.mrf.mxu0
      %v1895 = vadd.f32 %v1782, %v1894
      %1896 = vmatmul.f32.gmra.mxu0 %v1702
      %v1897 = vpop.f32.mrf.mxu0
      %v1898 = vadd.f32 %v1785, %v1897
      %1899 = vmatmul.f32.gmra.mxu0 %v1704
      %v1900 = vpop.f32.mrf.mxu0
      %v1901 = vadd.f32 %v1788, %v1900
      %1902 = vmatmul.f32.gmra.mxu0 %v1706
      %v1903 = vpop.f32.mrf.mxu0
      %v1904 = vadd.f32 %v1791, %v1903
      %1905 = vmatmul.f32.gmra.mxu0 %v1708
      %v1906 = vpop.f32.mrf.mxu0
      %v1907 = vadd.f32 %v1794, %v1906
      %1908 = vmatmul.f32.gmra.mxu0 %v1710
      %v1909 = vpop.f32.mrf.mxu0
      %v1910 = vadd.f32 %v1797, %v1909
      %1911 = vmatmul.f32.gmra.mxu0 %v1712
      %v1912 = vpop.f32.mrf.mxu0
      %v1913 = vadd.f32 %v1800, %v1912
      %1914 = vmatmul.f32.gmra.mxu0 %v1714
      %v1915 = vpop.f32.mrf.mxu0
      %v1916 = vadd.f32 %v1803, %v1915
      %1917 = vmatmul.f32.gmra.mxu0 %v1716
      %v1918 = vpop.f32.mrf.mxu0
      %v1919 = vadd.f32 %v1806, %v1918
      %1920 = vmatmul.f32.gmra.mxu0 %v1718
      %v1921 = vpop.f32.mrf.mxu0
      %v1922 = vadd.f32 %v1809, %v1921
      %1923 = vmatmul.f32.gmra.mxu0 %v1720
      %v1924 = vpop.f32.mrf.mxu0
      %v1925 = vadd.f32 %v1812, %v1924
      %1926 = vmatmul.f32.gmra.mxu0 %v1722
      %v1927 = vpop.f32.mrf.mxu0
      %v1928 = vadd.f32 %v1815, %v1927
      %1929 = vmatmul.f32.gmra.mxu0 %v1724
      %v1930 = vpop.f32.mrf.mxu0
      %v1931 = vadd.f32 %v1818, %v1930
      %1932 = vmatmul.f32.gmra.mxu0 %v1726
      %v1933 = vpop.f32.mrf.mxu0
      %v1934 = vadd.f32 %v1821, %v1933
      %1935 = vmatmul.f32.gmra.mxu0 %v1728
      %v1936 = vpop.f32.mrf.mxu0
      %v1937 = vadd.f32 %v1824, %v1936
      %1938 = vmatmul.f32.gmra.mxu0 %v1730
      %v1939 = vpop.f32.mrf.mxu0
      %v1940 = vadd.f32 %v1827, %v1939
      %1941 = vmatmul.f32.gmra.mxu0 %v1732
      %v1942 = vpop.f32.mrf.mxu0
      %v1943 = vadd.f32 %v1830, %v1942
      %1944 = vmatmul.f32.gmra.mxu0 %v1734
      %v1945 = vpop.f32.mrf.mxu0
      %v1946 = vadd.f32 %v1833, %v1945
      %1947 = vmatmul.f32.gmra.mxu0 %v1736
      %v1948 = vpop.f32.mrf.mxu0
      %v1949 = vadd.f32 %v1836, %v1948
      %1950 = vmatmul.f32.gmra.mxu0 %v1738
      %v1951 = vpop.f32.mrf.mxu0
      %v1952 = vadd.f32 %v1839, %v1951
      %1953 = vmatmul.f32.gmra.mxu0 %v1740
      %v1954 = vpop.f32.mrf.mxu0
      %v1955 = vadd.f32 %v1842, %v1954
      %1956 = vmatmul.f32.gmra.mxu0 %v1742
      %v1957 = vpop.f32.mrf.mxu0
      %v1958 = vadd.f32 %v1845, %v1957
      %1959 = vmatmul.f32.gmra.mxu0 %v1744
      %v1960 = vpop.f32.mrf.mxu0
      %v1961 = vadd.f32 %v1848, %v1960
      %1962 = vmatmul.f32.gmra.mxu0 %v1746
      %v1963 = vpop.f32.mrf.mxu0
      %v1964 = vadd.f32 %v1851, %v1963
      %1965 = vmatmul.f32.gmra.mxu0 %v1748
      %v1966 = vpop.f32.mrf.mxu0
      %v1967 = vadd.f32 %v1854, %v1966
      %1968 = vmatmul.f32.gmra.mxu0 %v1750
      %v1969 = vpop.f32.mrf.mxu0
      %v1970 = vadd.f32 %v1857, %v1969
      %1971 = vmatmul.f32.gmra.mxu0 %v1752
      %v1972 = vpop.f32.mrf.mxu0
      %v1973 = vadd.f32 %v1860, %v1972
      %1974 = vmatmul.f32.gmra.mxu0 %v1754
      %v1975 = vpop.f32.mrf.mxu0
      %v1976 = vadd.f32 %v1863, %v1975
      %1977 = vmatmul.f32.gmra.mxu0 %v1756
      %v1978 = vpop.f32.mrf.mxu0
      %v1979 = vadd.f32 %v1866, %v1978
      %1980 = vmatmul.f32.gmra.mxu0 %v1758
      %v1981 = vpop.f32.mrf.mxu0
      %v1982 = vadd.f32 %v1869, %v1981
      %1983 = vmatmul.f32.gmra.mxu0 %v1760
      %v1984 = vpop.f32.mrf.mxu0
      %v1985 = vadd.f32 %v1872, %v1984
      %1986 = vdwg.mxu0
      %s1987 = sld [smem:[#allocation4]]
      %v1988 = vstv %s1987
      %v1989 = vmul.f32 %v1988, %v1892
      %v1990 = vmul.f32 %v1988, %v1895
      %v1991 = vmul.f32 %v1988, %v1898
      %v1992 = vmul.f32 %v1988, %v1901
      %v1993 = vmul.f32 %v1988, %v1904
      %v1994 = vmul.f32 %v1988, %v1907
      %v1995 = vmul.f32 %v1988, %v1910
      %v1996 = vmul.f32 %v1988, %v1913
      %v1997 = vmul.f32 %v1988, %v1916
      %v1998 = vmul.f32 %v1988, %v1919
      %v1999 = vmul.f32 %v1988, %v1922
      %v2000 = vmul.f32 %v1988, %v1925
      %v2001 = vmul.f32 %v1988, %v1928
      %v2002 = vmul.f32 %v1988, %v1931
      %v2003 = vmul.f32 %v1988, %v1934
      %v2004 = vmul.f32 %v1988, %v1937
      %v2005 = vmul.f32 %v1988, %v1940
      %v2006 = vmul.f32 %v1988, %v1943
      %v2007 = vmul.f32 %v1988, %v1946
      %v2008 = vmul.f32 %v1988, %v1949
      %v2009 = vmul.f32 %v1988, %v1952
      %v2010 = vmul.f32 %v1988, %v1955
      %v2011 = vmul.f32 %v1988, %v1958
      %v2012 = vmul.f32 %v1988, %v1961
      %v2013 = vmul.f32 %v1988, %v1964
      %v2014 = vmul.f32 %v1988, %v1967
      %v2015 = vmul.f32 %v1988, %v1970
      %v2016 = vmul.f32 %v1988, %v1973
      %v2017 = vmul.f32 %v1988, %v1976
      %v2018 = vmul.f32 %v1988, %v1979
      %v2019 = vmul.f32 %v1988, %v1982
      %v2020 = vmul.f32 %v1988, %v1985
      %v2021 = vadd.f32 %v1989, %v578
      %v2022 = vadd.f32 %v1990, %v579
      %v2023 = vadd.f32 %v1991, %v580
      %v2024 = vadd.f32 %v1992, %v581
      %v2025 = vadd.f32 %v1993, %v582
      %v2026 = vadd.f32 %v1994, %v583
      %v2027 = vadd.f32 %v1995, %v584
      %v2028 = vadd.f32 %v1996, %v585
      %v2029 = vadd.f32 %v1997, %v586
      %v2030 = vadd.f32 %v1998, %v587
      %v2031 = vadd.f32 %v1999, %v588
      %v2032 = vadd.f32 %v2000, %v589
      %v2033 = vadd.f32 %v2001, %v590
      %v2034 = vadd.f32 %v2002, %v591
      %v2035 = vadd.f32 %v2003, %v592
      %v2036 = vadd.f32 %v2004, %v593
      %v2037 = vadd.f32 %v2005, %v594
      %v2038 = vadd.f32 %v2006, %v595
      %v2039 = vadd.f32 %v2007, %v596
      %v2040 = vadd.f32 %v2008, %v597
      %v2041 = vadd.f32 %v2009, %v598
      %v2042 = vadd.f32 %v2010, %v599
      %v2043 = vadd.f32 %v2011, %v600
      %v2044 = vadd.f32 %v2012, %v601
      %v2045 = vadd.f32 %v2013, %v602
      %v2046 = vadd.f32 %v2014, %v603
      %v2047 = vadd.f32 %v2015, %v604
      %v2048 = vadd.f32 %v2016, %v605
      %v2049 = vadd.f32 %v2017, %v606
      %v2050 = vadd.f32 %v2018, %v607
      %v2051 = vadd.f32 %v2019, %v608
      %v2052 = vadd.f32 %v2020, %v609
      %2053 = vst.msk [vmem:[#allocation2] sm:$0xff] %vm630, %v2021
      %2054 = vst.msk [vmem:[#allocation2 + $0x8] sm:$0xff] %vm630, %v2022
      %2055 = vst.msk [vmem:[#allocation2 + $0x10] sm:$0xff] %vm630, %v2023
      %2056 = vst.msk [vmem:[#allocation2 + $0x18] sm:$0xff] %vm630, %v2024
      %2057 = vst.msk [vmem:[#allocation2 + $0x20] sm:$0xff] %vm630, %v2025
      %2058 = vst.msk [vmem:[#allocation2 + $0x28] sm:$0xff] %vm630, %v2026
      %2059 = vst.msk [vmem:[#allocation2 + $0x30] sm:$0xff] %vm630, %v2027
      %2060 = vst.msk [vmem:[#allocation2 + $0x38] sm:$0xff] %vm630, %v2028
      %2061 = vst.msk [vmem:[#allocation2 + $0x40] sm:$0xff] %vm630, %v2029
      %2062 = vst.msk [vmem:[#allocation2 + $0x48] sm:$0xff] %vm630, %v2030
      %2063 = vst.msk [vmem:[#allocation2 + $0x50] sm:$0xff] %vm630, %v2031
      %2064 = vst.msk [vmem:[#allocation2 + $0x58] sm:$0xff] %vm630, %v2032
      %2065 = vst.msk [vmem:[#allocation2 + $0x60] sm:$0xff] %vm630, %v2033
      %2066 = vst.msk [vmem:[#allocation2 + $0x68] sm:$0xff] %vm630, %v2034
      %2067 = vst.msk [vmem:[#allocation2 + $0x70] sm:$0xff] %vm630, %v2035
      %2068 = vst.msk [vmem:[#allocation2 + $0x78] sm:$0xff] %vm630, %v2036
      %2069 = vst.msk [vmem:[#allocation2 + $0x80] sm:$0xff] %vm630, %v2037
      %2070 = vst.msk [vmem:[#allocation2 + $0x88] sm:$0xff] %vm630, %v2038
      %2071 = vst.msk [vmem:[#allocation2 + $0x90] sm:$0xff] %vm630, %v2039
      %2072 = vst.msk [vmem:[#allocation2 + $0x98] sm:$0xff] %vm630, %v2040
      %2073 = vst.msk [vmem:[#allocation2 + $0xa0] sm:$0xff] %vm630, %v2041
      %2074 = vst.msk [vmem:[#allocation2 + $0xa8] sm:$0xff] %vm630, %v2042
      %2075 = vst.msk [vmem:[#allocation2 + $0xb0] sm:$0xff] %vm630, %v2043
      %2076 = vst.msk [vmem:[#allocation2 + $0xb8] sm:$0xff] %vm630, %v2044
      %2077 = vst.msk [vmem:[#allocation2 + $0xc0] sm:$0xff] %vm630, %v2045
      %2078 = vst.msk [vmem:[#allocation2 + $0xc8] sm:$0xff] %vm630, %v2046
      %2079 = vst.msk [vmem:[#allocation2 + $0xd0] sm:$0xff] %vm630, %v2047
      %2080 = vst.msk [vmem:[#allocation2 + $0xd8] sm:$0xff] %vm630, %v2048
      %2081 = vst.msk [vmem:[#allocation2 + $0xe0] sm:$0xff] %vm630, %v2049
      %2082 = vst.msk [vmem:[#allocation2 + $0xe8] sm:$0xff] %vm630, %v2050
      %2083 = vst.msk [vmem:[#allocation2 + $0xf0] sm:$0xff] %vm630, %v2051
      %2084 = vst.msk [vmem:[#allocation2 + $0xf8] sm:$0xff] %vm630, %v2052
      %v2085 = vld [vmem:[#allocation2] ss:$16 sm:$0x3]
      %v2086 = vld [vmem:[#allocation2] ss:$16 sm:$0xc]
      %v2087 = vor.u32 %v2085, %v2086
      %v2088 = vld [vmem:[#allocation2] ss:$16 sm:$0x30]
      %v2089 = vor.u32 %v2087, %v2088
      %v2090 = vld [vmem:[#allocation2] ss:$16 sm:$0xc0]
      %v2091 = vor.u32 %v2089, %v2090
      %s2092 = scalar_lea.vmem [#allocation2], 128
      %v2093 = vld [vmem:[%s2092] ss:$16 sm:$0x3]
      %v2094 = vld [vmem:[%s2092] ss:$16 sm:$0xc]
      %v2095 = vor.u32 %v2093, %v2094
      %v2096 = vld [vmem:[%s2092] ss:$16 sm:$0x30]
      %v2097 = vor.u32 %v2095, %v2096
      %v2098 = vld [vmem:[%s2092] ss:$16 sm:$0xc0]
      %v2099 = vor.u32 %v2097, %v2098
      %2100 = vst.msk [vmem:[#allocation3] sm:$0xff] %vm630, %v2091
      %2101 = vst.msk [vmem:[#allocation3 + $0x10] sm:$0xff] %vm630, %v2099
      %s2102 = scalar_lea.vmem [#allocation2], 1
      %v2103 = vld [vmem:[%s2102] ss:$16 sm:$0x3]
      %v2104 = vld [vmem:[%s2102] ss:$16 sm:$0xc]
      %v2105 = vor.u32 %v2103, %v2104
      %v2106 = vld [vmem:[%s2102] ss:$16 sm:$0x30]
      %v2107 = vor.u32 %v2105, %v2106
      %v2108 = vld [vmem:[%s2102] ss:$16 sm:$0xc0]
      %v2109 = vor.u32 %v2107, %v2108
      %s2110 = scalar_lea.vmem [#allocation2], 129
      %v2111 = vld [vmem:[%s2110] ss:$16 sm:$0x3]
      %v2112 = vld [vmem:[%s2110] ss:$16 sm:$0xc]
      %v2113 = vor.u32 %v2111, %v2112
      %v2114 = vld [vmem:[%s2110] ss:$16 sm:$0x30]
      %v2115 = vor.u32 %v2113, %v2114
      %v2116 = vld [vmem:[%s2110] ss:$16 sm:$0xc0]
      %v2117 = vor.u32 %v2115, %v2116
      %2120 = vrot.lane.b32.xlu0 %v2109, 16
      %v2121 = vpop.permute.xlu0 %2120
      %2122 = vrot.lane.b32.xlu0 %v2117, 16
      %v2123 = vpop.permute.xlu0 %2122
      %vm2126 = vcmask 261248
      %2127 = vst.msk [vmem:[#allocation3] sm:$0xff] %vm2126, %v2121
      %2128 = vst.msk [vmem:[#allocation3 + $0x10] sm:$0xff] %vm2126, %v2123
      %s2129 = scalar_lea.vmem [#allocation2], 2
      %v2130 = vld [vmem:[%s2129] ss:$16 sm:$0x3]
      %v2131 = vld [vmem:[%s2129] ss:$16 sm:$0xc]
      %v2132 = vor.u32 %v2130, %v2131
      %v2133 = vld [vmem:[%s2129] ss:$16 sm:$0x30]
      %v2134 = vor.u32 %v2132, %v2133
      %v2135 = vld [vmem:[%s2129] ss:$16 sm:$0xc0]
      %v2136 = vor.u32 %v2134, %v2135
      %s2137 = scalar_lea.vmem [#allocation2], 130
      %v2138 = vld [vmem:[%s2137] ss:$16 sm:$0x3]
      %v2139 = vld [vmem:[%s2137] ss:$16 sm:$0xc]
      %v2140 = vor.u32 %v2138, %v2139
      %v2141 = vld [vmem:[%s2137] ss:$16 sm:$0x30]
      %v2142 = vor.u32 %v2140, %v2141
      %v2143 = vld [vmem:[%s2137] ss:$16 sm:$0xc0]
      %v2144 = vor.u32 %v2142, %v2143
      %2147 = vrot.lane.b32.xlu0 %v2136, 32
      %v2148 = vpop.permute.xlu0 %2147
      %2149 = vrot.lane.b32.xlu0 %v2144, 32
      %v2150 = vpop.permute.xlu0 %2149
      %vm2153 = vcmask 392448
      %2154 = vst.msk [vmem:[#allocation3] sm:$0xff] %vm2153, %v2148
      %2155 = vst.msk [vmem:[#allocation3 + $0x10] sm:$0xff] %vm2153, %v2150
      %s2156 = scalar_lea.vmem [#allocation2], 3
      %v2157 = vld [vmem:[%s2156] ss:$16 sm:$0x3]
      %v2158 = vld [vmem:[%s2156] ss:$16 sm:$0xc]
      %v2159 = vor.u32 %v2157, %v2158
      %v2160 = vld [vmem:[%s2156] ss:$16 sm:$0x30]
      %v2161 = vor.u32 %v2159, %v2160
      %v2162 = vld [vmem:[%s2156] ss:$16 sm:$0xc0]
      %v2163 = vor.u32 %v2161, %v2162
      %s2164 = scalar_lea.vmem [#allocation2], 131
      %v2165 = vld [vmem:[%s2164] ss:$16 sm:$0x3]
      %v2166 = vld [vmem:[%s2164] ss:$16 sm:$0xc]
      %v2167 = vor.u32 %v2165, %v2166
      %v2168 = vld [vmem:[%s2164] ss:$16 sm:$0x30]
      %v2169 = vor.u32 %v2167, %v2168
      %v2170 = vld [vmem:[%s2164] ss:$16 sm:$0xc0]
      %v2171 = vor.u32 %v2169, %v2170
      %2174 = vrot.lane.b32.xlu0 %v2163, 48
      %v2175 = vpop.permute.xlu0 %2174
      %2176 = vrot.lane.b32.xlu0 %v2171, 48
      %v2177 = vpop.permute.xlu0 %2176
      %vm2180 = vcmask 523648
      %2181 = vst.msk [vmem:[#allocation3] sm:$0xff] %vm2180, %v2175
      %2182 = vst.msk [vmem:[#allocation3 + $0x10] sm:$0xff] %vm2180, %v2177
      %s2183 = scalar_lea.vmem [#allocation2], 4
      %v2184 = vld [vmem:[%s2183] ss:$16 sm:$0x3]
      %v2185 = vld [vmem:[%s2183] ss:$16 sm:$0xc]
      %v2186 = vor.u32 %v2184, %v2185
      %v2187 = vld [vmem:[%s2183] ss:$16 sm:$0x30]
      %v2188 = vor.u32 %v2186, %v2187
      %v2189 = vld [vmem:[%s2183] ss:$16 sm:$0xc0]
      %v2190 = vor.u32 %v2188, %v2189
      %s2191 = scalar_lea.vmem [#allocation2], 132
      %v2192 = vld [vmem:[%s2191] ss:$16 sm:$0x3]
      %v2193 = vld [vmem:[%s2191] ss:$16 sm:$0xc]
      %v2194 = vor.u32 %v2192, %v2193
      %v2195 = vld [vmem:[%s2191] ss:$16 sm:$0x30]
      %v2196 = vor.u32 %v2194, %v2195
      %v2197 = vld [vmem:[%s2191] ss:$16 sm:$0xc0]
      %v2198 = vor.u32 %v2196, %v2197
      %2201 = vrot.lane.b32.xlu0 %v2190, 64
      %v2202 = vpop.permute.xlu0 %2201
      %2203 = vrot.lane.b32.xlu0 %v2198, 64
      %v2204 = vpop.permute.xlu0 %2203
      %vm2207 = vcmask 654848
      %2208 = vst.msk [vmem:[#allocation3] sm:$0xff] %vm2207, %v2202
      %2209 = vst.msk [vmem:[#allocation3 + $0x10] sm:$0xff] %vm2207, %v2204
      %s2210 = scalar_lea.vmem [#allocation2], 5
      %v2211 = vld [vmem:[%s2210] ss:$16 sm:$0x3]
      %v2212 = vld [vmem:[%s2210] ss:$16 sm:$0xc]
      %v2213 = vor.u32 %v2211, %v2212
      %v2214 = vld [vmem:[%s2210] ss:$16 sm:$0x30]
      %v2215 = vor.u32 %v2213, %v2214
      %v2216 = vld [vmem:[%s2210] ss:$16 sm:$0xc0]
      %v2217 = vor.u32 %v2215, %v2216
      %s2218 = scalar_lea.vmem [#allocation2], 133
      %v2219 = vld [vmem:[%s2218] ss:$16 sm:$0x3]
      %v2220 = vld [vmem:[%s2218] ss:$16 sm:$0xc]
      %v2221 = vor.u32 %v2219, %v2220
      %v2222 = vld [vmem:[%s2218] ss:$16 sm:$0x30]
      %v2223 = vor.u32 %v2221, %v2222
      %v2224 = vld [vmem:[%s2218] ss:$16 sm:$0xc0]
      %v2225 = vor.u32 %v2223, %v2224
      %2228 = vrot.lane.b32.xlu0 %v2217, 80
      %v2229 = vpop.permute.xlu0 %2228
      %2230 = vrot.lane.b32.xlu0 %v2225, 80
      %v2231 = vpop.permute.xlu0 %2230
      %vm2234 = vcmask 786048
      %2235 = vst.msk [vmem:[#allocation3] sm:$0xff] %vm2234, %v2229
      %2236 = vst.msk [vmem:[#allocation3 + $0x10] sm:$0xff] %vm2234, %v2231
      %s2237 = scalar_lea.vmem [#allocation2], 6
      %v2238 = vld [vmem:[%s2237] ss:$16 sm:$0x3]
      %v2239 = vld [vmem:[%s2237] ss:$16 sm:$0xc]
      %v2240 = vor.u32 %v2238, %v2239
      %v2241 = vld [vmem:[%s2237] ss:$16 sm:$0x30]
      %v2242 = vor.u32 %v2240, %v2241
      %v2243 = vld [vmem:[%s2237] ss:$16 sm:$0xc0]
      %v2244 = vor.u32 %v2242, %v2243
      %s2245 = scalar_lea.vmem [#allocation2], 134
      %v2246 = vld [vmem:[%s2245] ss:$16 sm:$0x3]
      %v2247 = vld [vmem:[%s2245] ss:$16 sm:$0xc]
      %v2248 = vor.u32 %v2246, %v2247
      %v2249 = vld [vmem:[%s2245] ss:$16 sm:$0x30]
      %v2250 = vor.u32 %v2248, %v2249
      %v2251 = vld [vmem:[%s2245] ss:$16 sm:$0xc0]
      %v2252 = vor.u32 %v2250, %v2251
      %2255 = vrot.lane.b32.xlu0 %v2244, 96
      %v2256 = vpop.permute.xlu0 %2255
      %2257 = vrot.lane.b32.xlu0 %v2252, 96
      %v2258 = vpop.permute.xlu0 %2257
      %vm2261 = vcmask 917248
      %2262 = vst.msk [vmem:[#allocation3] sm:$0xff] %vm2261, %v2256
      %2263 = vst.msk [vmem:[#allocation3 + $0x10] sm:$0xff] %vm2261, %v2258
      %s2264 = scalar_lea.vmem [#allocation2], 7
      %v2265 = vld [vmem:[%s2264] ss:$16 sm:$0x3]
      %v2266 = vld [vmem:[%s2264] ss:$16 sm:$0xc]
      %v2267 = vor.u32 %v2265, %v2266
      %v2268 = vld [vmem:[%s2264] ss:$16 sm:$0x30]
      %v2269 = vor.u32 %v2267, %v2268
      %v2270 = vld [vmem:[%s2264] ss:$16 sm:$0xc0]
      %v2271 = vor.u32 %v2269, %v2270
      %s2272 = scalar_lea.vmem [#allocation2], 135
      %v2273 = vld [vmem:[%s2272] ss:$16 sm:$0x3]
      %v2274 = vld [vmem:[%s2272] ss:$16 sm:$0xc]
      %v2275 = vor.u32 %v2273, %v2274
      %v2276 = vld [vmem:[%s2272] ss:$16 sm:$0x30]
      %v2277 = vor.u32 %v2275, %v2276
      %v2278 = vld [vmem:[%s2272] ss:$16 sm:$0xc0]
      %v2279 = vor.u32 %v2277, %v2278
      %2282 = vrot.lane.b32.xlu0 %v2271, 112
      %v2283 = vpop.permute.xlu0 %2282
      %2284 = vrot.lane.b32.xlu0 %v2279, 112
      %v2285 = vpop.permute.xlu0 %2284
      %vm2288 = vcmask 1048448
      %2289 = vst.msk [vmem:[#allocation3] sm:$0xff] %vm2288, %v2283
      %2290 = vst.msk [vmem:[#allocation3 + $0x10] sm:$0xff] %vm2288, %v2285
      %s2291 = scalar_lea.vmem [#allocation2], 8
      %v2292 = vld [vmem:[%s2291] ss:$16 sm:$0x3]
      %v2293 = vld [vmem:[%s2291] ss:$16 sm:$0xc]
      %v2294 = vor.u32 %v2292, %v2293
      %v2295 = vld [vmem:[%s2291] ss:$16 sm:$0x30]
      %v2296 = vor.u32 %v2294, %v2295
      %v2297 = vld [vmem:[%s2291] ss:$16 sm:$0xc0]
      %v2298 = vor.u32 %v2296, %v2297
      %s2299 = scalar_lea.vmem [#allocation2], 136
      %v2300 = vld [vmem:[%s2299] ss:$16 sm:$0x3]
      %v2301 = vld [vmem:[%s2299] ss:$16 sm:$0xc]
      %v2302 = vor.u32 %v2300, %v2301
      %v2303 = vld [vmem:[%s2299] ss:$16 sm:$0x30]
      %v2304 = vor.u32 %v2302, %v2303
      %v2305 = vld [vmem:[%s2299] ss:$16 sm:$0xc0]
      %v2306 = vor.u32 %v2304, %v2305
      %2307 = vst.msk [vmem:[#allocation3 + $0x8] sm:$0xff] %vm630, %v2298
      %2308 = vst.msk [vmem:[#allocation3 + $0x18] sm:$0xff] %vm630, %v2306
      %s2309 = scalar_lea.vmem [#allocation2], 9
      %v2310 = vld [vmem:[%s2309] ss:$16 sm:$0x3]
      %v2311 = vld [vmem:[%s2309] ss:$16 sm:$0xc]
      %v2312 = vor.u32 %v2310, %v2311
      %v2313 = vld [vmem:[%s2309] ss:$16 sm:$0x30]
      %v2314 = vor.u32 %v2312, %v2313
      %v2315 = vld [vmem:[%s2309] ss:$16 sm:$0xc0]
      %v2316 = vor.u32 %v2314, %v2315
      %s2317 = scalar_lea.vmem [#allocation2], 137
      %v2318 = vld [vmem:[%s2317] ss:$16 sm:$0x3]
      %v2319 = vld [vmem:[%s2317] ss:$16 sm:$0xc]
      %v2320 = vor.u32 %v2318, %v2319
      %v2321 = vld [vmem:[%s2317] ss:$16 sm:$0x30]
      %v2322 = vor.u32 %v2320, %v2321
      %v2323 = vld [vmem:[%s2317] ss:$16 sm:$0xc0]
      %v2324 = vor.u32 %v2322, %v2323
      %2327 = vrot.lane.b32.xlu0 %v2316, 16
      %v2328 = vpop.permute.xlu0 %2327
      %2329 = vrot.lane.b32.xlu0 %v2324, 16
      %v2330 = vpop.permute.xlu0 %2329
      %2333 = vst.msk [vmem:[#allocation3 + $0x8] sm:$0xff] %vm2126, %v2328
      %2334 = vst.msk [vmem:[#allocation3 + $0x18] sm:$0xff] %vm2126, %v2330
      %s2335 = scalar_lea.vmem [#allocation2], 10
      %v2336 = vld [vmem:[%s2335] ss:$16 sm:$0x3]
      %v2337 = vld [vmem:[%s2335] ss:$16 sm:$0xc]
      %v2338 = vor.u32 %v2336, %v2337
      %v2339 = vld [vmem:[%s2335] ss:$16 sm:$0x30]
      %v2340 = vor.u32 %v2338, %v2339
      %v2341 = vld [vmem:[%s2335] ss:$16 sm:$0xc0]
      %v2342 = vor.u32 %v2340, %v2341
      %s2343 = scalar_lea.vmem [#allocation2], 138
      %v2344 = vld [vmem:[%s2343] ss:$16 sm:$0x3]
      %v2345 = vld [vmem:[%s2343] ss:$16 sm:$0xc]
      %v2346 = vor.u32 %v2344, %v2345
      %v2347 = vld [vmem:[%s2343] ss:$16 sm:$0x30]
      %v2348 = vor.u32 %v2346, %v2347
      %v2349 = vld [vmem:[%s2343] ss:$16 sm:$0xc0]
      %v2350 = vor.u32 %v2348, %v2349
      %2353 = vrot.lane.b32.xlu0 %v2342, 32
      %v2354 = vpop.permute.xlu0 %2353
      %2355 = vrot.lane.b32.xlu0 %v2350, 32
      %v2356 = vpop.permute.xlu0 %2355
      %2359 = vst.msk [vmem:[#allocation3 + $0x8] sm:$0xff] %vm2153, %v2354
      %2360 = vst.msk [vmem:[#allocation3 + $0x18] sm:$0xff] %vm2153, %v2356
      %s2361 = scalar_lea.vmem [#allocation2], 11
      %v2362 = vld [vmem:[%s2361] ss:$16 sm:$0x3]
      %v2363 = vld [vmem:[%s2361] ss:$16 sm:$0xc]
      %v2364 = vor.u32 %v2362, %v2363
      %v2365 = vld [vmem:[%s2361] ss:$16 sm:$0x30]
      %v2366 = vor.u32 %v2364, %v2365
      %v2367 = vld [vmem:[%s2361] ss:$16 sm:$0xc0]
      %v2368 = vor.u32 %v2366, %v2367
      %s2369 = scalar_lea.vmem [#allocation2], 139
      %v2370 = vld [vmem:[%s2369] ss:$16 sm:$0x3]
      %v2371 = vld [vmem:[%s2369] ss:$16 sm:$0xc]
      %v2372 = vor.u32 %v2370, %v2371
      %v2373 = vld [vmem:[%s2369] ss:$16 sm:$0x30]
      %v2374 = vor.u32 %v2372, %v2373
      %v2375 = vld [vmem:[%s2369] ss:$16 sm:$0xc0]
      %v2376 = vor.u32 %v2374, %v2375
      %2379 = vrot.lane.b32.xlu0 %v2368, 48
      %v2380 = vpop.permute.xlu0 %2379
      %2381 = vrot.lane.b32.xlu0 %v2376, 48
      %v2382 = vpop.permute.xlu0 %2381
      %2385 = vst.msk [vmem:[#allocation3 + $0x8] sm:$0xff] %vm2180, %v2380
      %2386 = vst.msk [vmem:[#allocation3 + $0x18] sm:$0xff] %vm2180, %v2382
      %s2387 = scalar_lea.vmem [#allocation2], 12
      %v2388 = vld [vmem:[%s2387] ss:$16 sm:$0x3]
      %v2389 = vld [vmem:[%s2387] ss:$16 sm:$0xc]
      %v2390 = vor.u32 %v2388, %v2389
      %v2391 = vld [vmem:[%s2387] ss:$16 sm:$0x30]
      %v2392 = vor.u32 %v2390, %v2391
      %v2393 = vld [vmem:[%s2387] ss:$16 sm:$0xc0]
      %v2394 = vor.u32 %v2392, %v2393
      %s2395 = scalar_lea.vmem [#allocation2], 140
      %v2396 = vld [vmem:[%s2395] ss:$16 sm:$0x3]
      %v2397 = vld [vmem:[%s2395] ss:$16 sm:$0xc]
      %v2398 = vor.u32 %v2396, %v2397
      %v2399 = vld [vmem:[%s2395] ss:$16 sm:$0x30]
      %v2400 = vor.u32 %v2398, %v2399
      %v2401 = vld [vmem:[%s2395] ss:$16 sm:$0xc0]
      %v2402 = vor.u32 %v2400, %v2401
      %2405 = vrot.lane.b32.xlu0 %v2394, 64
      %v2406 = vpop.permute.xlu0 %2405
      %2407 = vrot.lane.b32.xlu0 %v2402, 64
      %v2408 = vpop.permute.xlu0 %2407
      %2411 = vst.msk [vmem:[#allocation3 + $0x8] sm:$0xff] %vm2207, %v2406
      %2412 = vst.msk [vmem:[#allocation3 + $0x18] sm:$0xff] %vm2207, %v2408
      %s2413 = scalar_lea.vmem [#allocation2], 13
      %v2414 = vld [vmem:[%s2413] ss:$16 sm:$0x3]
      %v2415 = vld [vmem:[%s2413] ss:$16 sm:$0xc]
      %v2416 = vor.u32 %v2414, %v2415
      %v2417 = vld [vmem:[%s2413] ss:$16 sm:$0x30]
      %v2418 = vor.u32 %v2416, %v2417
      %v2419 = vld [vmem:[%s2413] ss:$16 sm:$0xc0]
      %v2420 = vor.u32 %v2418, %v2419
      %s2421 = scalar_lea.vmem [#allocation2], 141
      %v2422 = vld [vmem:[%s2421] ss:$16 sm:$0x3]
      %v2423 = vld [vmem:[%s2421] ss:$16 sm:$0xc]
      %v2424 = vor.u32 %v2422, %v2423
      %v2425 = vld [vmem:[%s2421] ss:$16 sm:$0x30]
      %v2426 = vor.u32 %v2424, %v2425
      %v2427 = vld [vmem:[%s2421] ss:$16 sm:$0xc0]
      %v2428 = vor.u32 %v2426, %v2427
      %2431 = vrot.lane.b32.xlu0 %v2420, 80
      %v2432 = vpop.permute.xlu0 %2431
      %2433 = vrot.lane.b32.xlu0 %v2428, 80
      %v2434 = vpop.permute.xlu0 %2433
      %2437 = vst.msk [vmem:[#allocation3 + $0x8] sm:$0xff] %vm2234, %v2432
      %2438 = vst.msk [vmem:[#allocation3 + $0x18] sm:$0xff] %vm2234, %v2434
      %s2439 = scalar_lea.vmem [#allocation2], 14
      %v2440 = vld [vmem:[%s2439] ss:$16 sm:$0x3]
      %v2441 = vld [vmem:[%s2439] ss:$16 sm:$0xc]
      %v2442 = vor.u32 %v2440, %v2441
      %v2443 = vld [vmem:[%s2439] ss:$16 sm:$0x30]
      %v2444 = vor.u32 %v2442, %v2443
      %v2445 = vld [vmem:[%s2439] ss:$16 sm:$0xc0]
      %v2446 = vor.u32 %v2444, %v2445
      %s2447 = scalar_lea.vmem [#allocation2], 142
      %v2448 = vld [vmem:[%s2447] ss:$16 sm:$0x3]
      %v2449 = vld [vmem:[%s2447] ss:$16 sm:$0xc]
      %v2450 = vor.u32 %v2448, %v2449
      %v2451 = vld [vmem:[%s2447] ss:$16 sm:$0x30]
      %v2452 = vor.u32 %v2450, %v2451
      %v2453 = vld [vmem:[%s2447] ss:$16 sm:$0xc0]
      %v2454 = vor.u32 %v2452, %v2453
      %2457 = vrot.lane.b32.xlu0 %v2446, 96
      %v2458 = vpop.permute.xlu0 %2457
      %2459 = vrot.lane.b32.xlu0 %v2454, 96
      %v2460 = vpop.permute.xlu0 %2459
      %2463 = vst.msk [vmem:[#allocation3 + $0x8] sm:$0xff] %vm2261, %v2458
      %2464 = vst.msk [vmem:[#allocation3 + $0x18] sm:$0xff] %vm2261, %v2460
      %s2465 = scalar_lea.vmem [#allocation2], 15
      %v2466 = vld [vmem:[%s2465] ss:$16 sm:$0x3]
      %v2467 = vld [vmem:[%s2465] ss:$16 sm:$0xc]
      %v2468 = vor.u32 %v2466, %v2467
      %v2469 = vld [vmem:[%s2465] ss:$16 sm:$0x30]
      %v2470 = vor.u32 %v2468, %v2469
      %v2471 = vld [vmem:[%s2465] ss:$16 sm:$0xc0]
      %v2472 = vor.u32 %v2470, %v2471
      %s2473 = scalar_lea.vmem [#allocation2], 143
      %v2474 = vld [vmem:[%s2473] ss:$16 sm:$0x3]
      %v2475 = vld [vmem:[%s2473] ss:$16 sm:$0xc]
      %v2476 = vor.u32 %v2474, %v2475
      %v2477 = vld [vmem:[%s2473] ss:$16 sm:$0x30]
      %v2478 = vor.u32 %v2476, %v2477
      %v2479 = vld [vmem:[%s2473] ss:$16 sm:$0xc0]
      %v2480 = vor.u32 %v2478, %v2479
      %2483 = vrot.lane.b32.xlu0 %v2472, 112
      %v2484 = vpop.permute.xlu0 %2483
      %2485 = vrot.lane.b32.xlu0 %v2480, 112
      %v2486 = vpop.permute.xlu0 %2485
      %2489 = vst.msk [vmem:[#allocation3 + $0x8] sm:$0xff] %vm2288, %v2484
      %2490 = vst.msk [vmem:[#allocation3 + $0x18] sm:$0xff] %vm2288, %v2486
      %v2491 = vld [vmem:[#allocation3] sm:$0xff]
      %v2492 = vld [vmem:[#allocation3 + $0x8] sm:$0xff]
      %v2493 = vld [vmem:[#allocation3 + $0x10] sm:$0xff]
      %v2494 = vld [vmem:[#allocation3 + $0x18] sm:$0xff]
      %v2496 = vsel %vm630, %v2021, 0
      %v2499 = vsel %vm630, %v2022, 0
      %v2502 = vsel %vm630, %v2023, 0
      %v2505 = vsel %vm630, %v2024, 0
      %v2508 = vsel %vm630, %v2025, 0
      %v2511 = vsel %vm630, %v2026, 0
      %v2514 = vsel %vm630, %v2027, 0
      %v2517 = vsel %vm630, %v2028, 0
      %v2520 = vsel %vm630, %v2029, 0
      %v2523 = vsel %vm630, %v2030, 0
      %v2526 = vsel %vm630, %v2031, 0
      %v2529 = vsel %vm630, %v2032, 0
      %v2532 = vsel %vm630, %v2033, 0
      %v2535 = vsel %vm630, %v2034, 0
      %v2538 = vsel %vm630, %v2035, 0
      %v2541 = vsel %vm630, %v2036, 0
      %v2544 = vsel %vm630, %v2037, 0
      %v2547 = vsel %vm630, %v2038, 0
      %v2550 = vsel %vm630, %v2039, 0
      %v2553 = vsel %vm630, %v2040, 0
      %v2556 = vsel %vm630, %v2041, 0
      %v2559 = vsel %vm630, %v2042, 0
      %v2562 = vsel %vm630, %v2043, 0
      %v2565 = vsel %vm630, %v2044, 0
      %v2568 = vsel %vm630, %v2045, 0
      %v2571 = vsel %vm630, %v2046, 0
      %v2574 = vsel %vm630, %v2047, 0
      %v2577 = vsel %vm630, %v2048, 0
      %v2580 = vsel %vm630, %v2049, 0
      %v2583 = vsel %vm630, %v2050, 0
      %v2586 = vsel %vm630, %v2051, 0
      %v2589 = vsel %vm630, %v2052, 0
      %2591 = vmatpush.msra.mxu0 0.0
      %2592 = vmatpush.msra.mxu0 0.0
      %2593 = vmatpush.msra.mxu0 0.0
      %2594 = vmatpush.msra.mxu0 0.0
      %2595 = vmatpush.msra.mxu0 0.0
      %2596 = vmatpush.msra.mxu0 0.0
      %2597 = vmatpush.msra.mxu0 0.0
      %2598 = vmatpush.msra.mxu0 0.0
      %2599 = vmatpush.msra.mxu0 0.0
      %2600 = vmatpush.msra.mxu0 0.0
      %2601 = vmatpush.msra.mxu0 0.0
      %2602 = vmatpush.msra.mxu0 0.0
      %2603 = vmatpush.msra.mxu0 0.0
      %2604 = vmatpush.msra.mxu0 0.0
      %2605 = vmatpush.msra.mxu0 %v2493
      %2606 = vmatpush.msra.mxu0 %v2491
      %2607 = vmatmul.f32.gmra.mxu0 %v2496
      %v2608 = vpop.f32.mrf.mxu0
      %v2609 = vadd.f32 0.0, %v2608
      %2610 = vmatmul.f32.gmra.mxu0 %v2499
      %v2611 = vpop.f32.mrf.mxu0
      %v2612 = vadd.f32 0.0, %v2611
      %2613 = vmatmul.f32.gmra.mxu0 %v2502
      %v2614 = vpop.f32.mrf.mxu0
      %v2615 = vadd.f32 0.0, %v2614
      %2616 = vmatmul.f32.gmra.mxu0 %v2505
      %v2617 = vpop.f32.mrf.mxu0
      %v2618 = vadd.f32 0.0, %v2617
      %2619 = vmatmul.f32.gmra.mxu0 %v2508
      %v2620 = vpop.f32.mrf.mxu0
      %v2621 = vadd.f32 0.0, %v2620
      %2622 = vmatmul.f32.gmra.mxu0 %v2511
      %v2623 = vpop.f32.mrf.mxu0
      %v2624 = vadd.f32 0.0, %v2623
      %2625 = vmatmul.f32.gmra.mxu0 %v2514
      %v2626 = vpop.f32.mrf.mxu0
      %v2627 = vadd.f32 0.0, %v2626
      %2628 = vmatmul.f32.gmra.mxu0 %v2517
      %v2629 = vpop.f32.mrf.mxu0
      %v2630 = vadd.f32 0.0, %v2629
      %2631 = vmatmul.f32.gmra.mxu0 %v2520
      %v2632 = vpop.f32.mrf.mxu0
      %v2633 = vadd.f32 0.0, %v2632
      %2634 = vmatmul.f32.gmra.mxu0 %v2523
      %v2635 = vpop.f32.mrf.mxu0
      %v2636 = vadd.f32 0.0, %v2635
      %2637 = vmatmul.f32.gmra.mxu0 %v2526
      %v2638 = vpop.f32.mrf.mxu0
      %v2639 = vadd.f32 0.0, %v2638
      %2640 = vmatmul.f32.gmra.mxu0 %v2529
      %v2641 = vpop.f32.mrf.mxu0
      %v2642 = vadd.f32 0.0, %v2641
      %2643 = vmatmul.f32.gmra.mxu0 %v2532
      %v2644 = vpop.f32.mrf.mxu0
      %v2645 = vadd.f32 0.0, %v2644
      %2646 = vmatmul.f32.gmra.mxu0 %v2535
      %v2647 = vpop.f32.mrf.mxu0
      %v2648 = vadd.f32 0.0, %v2647
      %2649 = vmatmul.f32.gmra.mxu0 %v2538
      %v2650 = vpop.f32.mrf.mxu0
      %v2651 = vadd.f32 0.0, %v2650
      %2652 = vmatmul.f32.gmra.mxu0 %v2541
      %v2653 = vpop.f32.mrf.mxu0
      %v2654 = vadd.f32 0.0, %v2653
      %2655 = vmatmul.f32.gmra.mxu0 %v2544
      %v2656 = vpop.f32.mrf.mxu0
      %v2657 = vadd.f32 0.0, %v2656
      %2658 = vmatmul.f32.gmra.mxu0 %v2547
      %v2659 = vpop.f32.mrf.mxu0
      %v2660 = vadd.f32 0.0, %v2659
      %2661 = vmatmul.f32.gmra.mxu0 %v2550
      %v2662 = vpop.f32.mrf.mxu0
      %v2663 = vadd.f32 0.0, %v2662
      %2664 = vmatmul.f32.gmra.mxu0 %v2553
      %v2665 = vpop.f32.mrf.mxu0
      %v2666 = vadd.f32 0.0, %v2665
      %2667 = vmatmul.f32.gmra.mxu0 %v2556
      %v2668 = vpop.f32.mrf.mxu0
      %v2669 = vadd.f32 0.0, %v2668
      %2670 = vmatmul.f32.gmra.mxu0 %v2559
      %v2671 = vpop.f32.mrf.mxu0
      %v2672 = vadd.f32 0.0, %v2671
      %2673 = vmatmul.f32.gmra.mxu0 %v2562
      %v2674 = vpop.f32.mrf.mxu0
      %v2675 = vadd.f32 0.0, %v2674
      %2676 = vmatmul.f32.gmra.mxu0 %v2565
      %v2677 = vpop.f32.mrf.mxu0
      %v2678 = vadd.f32 0.0, %v2677
      %2679 = vmatmul.f32.gmra.mxu0 %v2568
      %v2680 = vpop.f32.mrf.mxu0
      %v2681 = vadd.f32 0.0, %v2680
      %2682 = vmatmul.f32.gmra.mxu0 %v2571
      %v2683 = vpop.f32.mrf.mxu0
      %v2684 = vadd.f32 0.0, %v2683
      %2685 = vmatmul.f32.gmra.mxu0 %v2574
      %v2686 = vpop.f32.mrf.mxu0
      %v2687 = vadd.f32 0.0, %v2686
      %2688 = vmatmul.f32.gmra.mxu0 %v2577
      %v2689 = vpop.f32.mrf.mxu0
      %v2690 = vadd.f32 0.0, %v2689
      %2691 = vmatmul.f32.gmra.mxu0 %v2580
      %v2692 = vpop.f32.mrf.mxu0
      %v2693 = vadd.f32 0.0, %v2692
      %2694 = vmatmul.f32.gmra.mxu0 %v2583
      %v2695 = vpop.f32.mrf.mxu0
      %v2696 = vadd.f32 0.0, %v2695
      %2697 = vmatmul.f32.gmra.mxu0 %v2586
      %v2698 = vpop.f32.mrf.mxu0
      %v2699 = vadd.f32 0.0, %v2698
      %2700 = vmatmul.f32.gmra.mxu0 %v2589
      %v2701 = vpop.f32.mrf.mxu0
      %v2702 = vadd.f32 0.0, %v2701
      %2703 = vdwg.mxu0
      %2704 = vmatpush.msra.mxu0 0.0
      %2705 = vmatpush.msra.mxu0 0.0
      %2706 = vmatpush.msra.mxu0 0.0
      %2707 = vmatpush.msra.mxu0 0.0
      %2708 = vmatpush.msra.mxu0 0.0
      %2709 = vmatpush.msra.mxu0 0.0
      %2710 = vmatpush.msra.mxu0 0.0
      %2711 = vmatpush.msra.mxu0 0.0
      %2712 = vmatpush.msra.mxu0 0.0
      %2713 = vmatpush.msra.mxu0 0.0
      %2714 = vmatpush.msra.mxu0 0.0
      %2715 = vmatpush.msra.mxu0 0.0
      %2716 = vmatpush.msra.mxu0 0.0
      %2717 = vmatpush.msra.mxu0 0.0
      %2718 = vmatpush.msra.mxu0 %v2494
      %2719 = vmatpush.msra.mxu0 %v2492
      %2720 = vmatmul.f32.gmra.mxu0 %v2496
      %v2721 = vpop.f32.mrf.mxu0
      %v2722 = vadd.f32 0.0, %v2721
      %2723 = vmatmul.f32.gmra.mxu0 %v2499
      %v2724 = vpop.f32.mrf.mxu0
      %v2725 = vadd.f32 0.0, %v2724
      %2726 = vmatmul.f32.gmra.mxu0 %v2502
      %v2727 = vpop.f32.mrf.mxu0
      %v2728 = vadd.f32 0.0, %v2727
      %2729 = vmatmul.f32.gmra.mxu0 %v2505
      %v2730 = vpop.f32.mrf.mxu0
      %v2731 = vadd.f32 0.0, %v2730
      %2732 = vmatmul.f32.gmra.mxu0 %v2508
      %v2733 = vpop.f32.mrf.mxu0
      %v2734 = vadd.f32 0.0, %v2733
      %2735 = vmatmul.f32.gmra.mxu0 %v2511
      %v2736 = vpop.f32.mrf.mxu0
      %v2737 = vadd.f32 0.0, %v2736
      %2738 = vmatmul.f32.gmra.mxu0 %v2514
      %v2739 = vpop.f32.mrf.mxu0
      %v2740 = vadd.f32 0.0, %v2739
      %2741 = vmatmul.f32.gmra.mxu0 %v2517
      %v2742 = vpop.f32.mrf.mxu0
      %v2743 = vadd.f32 0.0, %v2742
      %2744 = vmatmul.f32.gmra.mxu0 %v2520
      %v2745 = vpop.f32.mrf.mxu0
      %v2746 = vadd.f32 0.0, %v2745
      %2747 = vmatmul.f32.gmra.mxu0 %v2523
      %v2748 = vpop.f32.mrf.mxu0
      %v2749 = vadd.f32 0.0, %v2748
      %2750 = vmatmul.f32.gmra.mxu0 %v2526
      %v2751 = vpop.f32.mrf.mxu0
      %v2752 = vadd.f32 0.0, %v2751
      %2753 = vmatmul.f32.gmra.mxu0 %v2529
      %v2754 = vpop.f32.mrf.mxu0
      %v2755 = vadd.f32 0.0, %v2754
      %2756 = vmatmul.f32.gmra.mxu0 %v2532
      %v2757 = vpop.f32.mrf.mxu0
      %v2758 = vadd.f32 0.0, %v2757
      %2759 = vmatmul.f32.gmra.mxu0 %v2535
      %v2760 = vpop.f32.mrf.mxu0
      %v2761 = vadd.f32 0.0, %v2760
      %2762 = vmatmul.f32.gmra.mxu0 %v2538
      %v2763 = vpop.f32.mrf.mxu0
      %v2764 = vadd.f32 0.0, %v2763
      %2765 = vmatmul.f32.gmra.mxu0 %v2541
      %v2766 = vpop.f32.mrf.mxu0
      %v2767 = vadd.f32 0.0, %v2766
      %2768 = vmatmul.f32.gmra.mxu0 %v2544
      %v2769 = vpop.f32.mrf.mxu0
      %v2770 = vadd.f32 0.0, %v2769
      %2771 = vmatmul.f32.gmra.mxu0 %v2547
      %v2772 = vpop.f32.mrf.mxu0
      %v2773 = vadd.f32 0.0, %v2772
      %2774 = vmatmul.f32.gmra.mxu0 %v2550
      %v2775 = vpop.f32.mrf.mxu0
      %v2776 = vadd.f32 0.0, %v2775
      %2777 = vmatmul.f32.gmra.mxu0 %v2553
      %v2778 = vpop.f32.mrf.mxu0
      %v2779 = vadd.f32 0.0, %v2778
      %2780 = vmatmul.f32.gmra.mxu0 %v2556
      %v2781 = vpop.f32.mrf.mxu0
      %v2782 = vadd.f32 0.0, %v2781
      %2783 = vmatmul.f32.gmra.mxu0 %v2559
      %v2784 = vpop.f32.mrf.mxu0
      %v2785 = vadd.f32 0.0, %v2784
      %2786 = vmatmul.f32.gmra.mxu0 %v2562
      %v2787 = vpop.f32.mrf.mxu0
      %v2788 = vadd.f32 0.0, %v2787
      %2789 = vmatmul.f32.gmra.mxu0 %v2565
      %v2790 = vpop.f32.mrf.mxu0
      %v2791 = vadd.f32 0.0, %v2790
      %2792 = vmatmul.f32.gmra.mxu0 %v2568
      %v2793 = vpop.f32.mrf.mxu0
      %v2794 = vadd.f32 0.0, %v2793
      %2795 = vmatmul.f32.gmra.mxu0 %v2571
      %v2796 = vpop.f32.mrf.mxu0
      %v2797 = vadd.f32 0.0, %v2796
      %2798 = vmatmul.f32.gmra.mxu0 %v2574
      %v2799 = vpop.f32.mrf.mxu0
      %v2800 = vadd.f32 0.0, %v2799
      %2801 = vmatmul.f32.gmra.mxu0 %v2577
      %v2802 = vpop.f32.mrf.mxu0
      %v2803 = vadd.f32 0.0, %v2802
      %2804 = vmatmul.f32.gmra.mxu0 %v2580
      %v2805 = vpop.f32.mrf.mxu0
      %v2806 = vadd.f32 0.0, %v2805
      %2807 = vmatmul.f32.gmra.mxu0 %v2583
      %v2808 = vpop.f32.mrf.mxu0
      %v2809 = vadd.f32 0.0, %v2808
      %2810 = vmatmul.f32.gmra.mxu0 %v2586
      %v2811 = vpop.f32.mrf.mxu0
      %v2812 = vadd.f32 0.0, %v2811
      %2813 = vmatmul.f32.gmra.mxu0 %v2589
      %v2814 = vpop.f32.mrf.mxu0
      %v2815 = vadd.f32 0.0, %v2814
      %2816 = vdwg.mxu0
      %2817 = vst [vmem:[%s353] sm:$0xff] %v2609
      %2818 = vst [vmem:[%s353 + $0x8] sm:$0xff] %v2722
      %2819 = vst [vmem:[%s353 + $0x10] sm:$0xff] %v2612
      %2820 = vst [vmem:[%s353 + $0x18] sm:$0xff] %v2725
      %2821 = vst [vmem:[%s353 + $0x20] sm:$0xff] %v2615
      %2822 = vst [vmem:[%s353 + $0x28] sm:$0xff] %v2728
      %2823 = vst [vmem:[%s353 + $0x30] sm:$0xff] %v2618
      %2824 = vst [vmem:[%s353 + $0x38] sm:$0xff] %v2731
      %2825 = vst [vmem:[%s353 + $0x40] sm:$0xff] %v2621
      %2826 = vst [vmem:[%s353 + $0x48] sm:$0xff] %v2734
      %2827 = vst [vmem:[%s353 + $0x50] sm:$0xff] %v2624
      %2828 = vst [vmem:[%s353 + $0x58] sm:$0xff] %v2737
      %2829 = vst [vmem:[%s353 + $0x60] sm:$0xff] %v2627
      %2830 = vst [vmem:[%s353 + $0x68] sm:$0xff] %v2740
      %2831 = vst [vmem:[%s353 + $0x70] sm:$0xff] %v2630
      %2832 = vst [vmem:[%s353 + $0x78] sm:$0xff] %v2743
      %2833 = vst [vmem:[%s353 + $0x80] sm:$0xff] %v2633
      %2834 = vst [vmem:[%s353 + $0x88] sm:$0xff] %v2746
      %2835 = vst [vmem:[%s353 + $0x90] sm:$0xff] %v2636
      %2836 = vst [vmem:[%s353 + $0x98] sm:$0xff] %v2749
      %2837 = vst [vmem:[%s353 + $0xa0] sm:$0xff] %v2639
      %2838 = vst [vmem:[%s353 + $0xa8] sm:$0xff] %v2752
      %2839 = vst [vmem:[%s353 + $0xb0] sm:$0xff] %v2642
      %2840 = vst [vmem:[%s353 + $0xb8] sm:$0xff] %v2755
      %2841 = vst [vmem:[%s353 + $0xc0] sm:$0xff] %v2645
      %2842 = vst [vmem:[%s353 + $0xc8] sm:$0xff] %v2758
      %2843 = vst [vmem:[%s353 + $0xd0] sm:$0xff] %v2648
      %2844 = vst [vmem:[%s353 + $0xd8] sm:$0xff] %v2761
      %2845 = vst [vmem:[%s353 + $0xe0] sm:$0xff] %v2651
      %2846 = vst [vmem:[%s353 + $0xe8] sm:$0xff] %v2764
      %2847 = vst [vmem:[%s353 + $0xf0] sm:$0xff] %v2654
      %2848 = vst [vmem:[%s353 + $0xf8] sm:$0xff] %v2767
      %2849 = vst [vmem:[%s353 + $0x100] sm:$0xff] %v2657
      %2850 = vst [vmem:[%s353 + $0x108] sm:$0xff] %v2770
      %2851 = vst [vmem:[%s353 + $0x110] sm:$0xff] %v2660
      %2852 = vst [vmem:[%s353 + $0x118] sm:$0xff] %v2773
      %2853 = vst [vmem:[%s353 + $0x120] sm:$0xff] %v2663
      %2854 = vst [vmem:[%s353 + $0x128] sm:$0xff] %v2776
      %2855 = vst [vmem:[%s353 + $0x130] sm:$0xff] %v2666
      %2856 = vst [vmem:[%s353 + $0x138] sm:$0xff] %v2779
      %2857 = vst [vmem:[%s353 + $0x140] sm:$0xff] %v2669
      %2858 = vst [vmem:[%s353 + $0x148] sm:$0xff] %v2782
      %2859 = vst [vmem:[%s353 + $0x150] sm:$0xff] %v2672
      %2860 = vst [vmem:[%s353 + $0x158] sm:$0xff] %v2785
      %2861 = vst [vmem:[%s353 + $0x160] sm:$0xff] %v2675
      %2862 = vst [vmem:[%s353 + $0x168] sm:$0xff] %v2788
      %2863 = vst [vmem:[%s353 + $0x170] sm:$0xff] %v2678
      %2864 = vst [vmem:[%s353 + $0x178] sm:$0xff] %v2791
      %2865 = vst [vmem:[%s353 + $0x180] sm:$0xff] %v2681
      %2866 = vst [vmem:[%s353 + $0x188] sm:$0xff] %v2794
      %2867 = vst [vmem:[%s353 + $0x190] sm:$0xff] %v2684
      %2868 = vst [vmem:[%s353 + $0x198] sm:$0xff] %v2797
      %2869 = vst [vmem:[%s353 + $0x1a0] sm:$0xff] %v2687
      %2870 = vst [vmem:[%s353 + $0x1a8] sm:$0xff] %v2800
      %2871 = vst [vmem:[%s353 + $0x1b0] sm:$0xff] %v2690
      %2872 = vst [vmem:[%s353 + $0x1b8] sm:$0xff] %v2803
      %2873 = vst [vmem:[%s353 + $0x1c0] sm:$0xff] %v2693
      %2874 = vst [vmem:[%s353 + $0x1c8] sm:$0xff] %v2806
      %2875 = vst [vmem:[%s353 + $0x1d0] sm:$0xff] %v2696
      %2876 = vst [vmem:[%s353 + $0x1d8] sm:$0xff] %v2809
      %2877 = vst [vmem:[%s353 + $0x1e0] sm:$0xff] %v2699
      %2878 = vst [vmem:[%s353 + $0x1e8] sm:$0xff] %v2812
      %2879 = vst [vmem:[%s353 + $0x1f0] sm:$0xff] %v2702
      %2880 = vst [vmem:[%s353 + $0x1f8] sm:$0xff] %v2815
      %p2881 = scmp.lt.s32.totalorder %s21, 1
      %s2882 = scalar_select %p2881, %s21, 1
      %s2883 = smul.addr %s2882, 64
      %s2884 = smul.addr %s2883, 8
      %s2885 = scalar_lea.vmem %s9, %s2884
      // Predicated region
      $region57: #{scsa_forward.1} parent=55 // pred_check
        %p2886 = pneg %p238
      $region58: #{scsa_forward.1} parent=55 // pred_check_branch
        %2888 = sbr.rel (%p2886) target = $region60
      $region59: #{scsa_forward.1} parent=55 // pred_region
        _
      $region60: #{scsa_forward.1} parent=55 // pred_fallthru
        _
    $region56: #{scsa_forward.1} parent=5 // pred_fallthru
      _
    %p2889 = scmp.le.s32.totalorder 2, %s16
    // Predicated region
    $region61: #{scsa_forward.1} parent=5 // pred_check
      %p2890 = pneg %p2889
    $region62: #{scsa_forward.1} parent=5 // pred_check_branch
      %2892 = sbr.rel (%p2890) target = $region64
    $region63: #{scsa_forward.1} parent=5 // pred_region
      %s2893 = ssub.s32 %s16, 2
      // Predicated region
      $region65: #{scsa_forward.1} parent=63 // pred_check
        %p2894 = pneg %p244
      $region66: #{scsa_forward.1} parent=63 // pred_check_branch
        %2896 = sbr.rel (%p2894) target = $region68
      $region67: #{scsa_forward.1} parent=63 // pred_region
        %p2897 = scmp.lt.s32.totalorder %s22, 1
        %s2898 = scalar_select %p2897, %s22, 1
        %s2899 = smul.addr %s2898, 64
        %s2900 = smul.addr %s2899, 8
        %s2901 = scalar_lea.vmem %s9, %s2900
      $region68: #{scsa_forward.1} parent=63 // pred_fallthru
        _
    $region64: #{scsa_forward.1} parent=5 // pred_fallthru
      _
  $region6: #{scsa_forward.1} parent=0 // loop_footer
    %s20 = sadd.s32 1, %s16
  $region7: #{scsa_forward.1} parent=0 // loop_footer_branch
    %15 = sbr.rel target = $region3
  $region8: #{scsa_forward.1} parent=0 // loop_exit
    _

</llo_original>
